<compile_context>
chip_gen: v7x
topology: tpu7x:2x2x1
jax: 0.10.0
libtpu: 0.0.40
codegen_flags: <defaults>
</compile_context>

<pallas_src>
import jax
import jax.numpy as jnp
from jax.experimental import pallas as pl
from jax.experimental.pallas import tpu as pltpu

LANE = 128
SUBLANE = 8


def encoder_kernel(x_ref, wih_ref, whh_ref, bih_ref, bhh_ref,
                   w1_ref, b1_ref, w2_ref, b2_ref, o_ref, gi_scr):
    """x_ref rows are (reversed-)time-major: row = s*Bp + b, s=0 is original t=T-1."""
    T, Bp, GW = gi_scr.shape          # GW = 3*H padded up to a multiple of 128 lanes
    H = whh_ref.shape[0]

    # ---- fused input projection (off the serial path): one MXU pass for all gates
    #      and all timesteps, then stage time-major into VMEM scratch.
    gi = (jnp.dot(x_ref[...], wih_ref[...], preferred_element_type=jnp.float32)
          + bih_ref[...])                               # (T*Bp, GW)
    gi_scr[...] = gi.reshape(T, Bp, GW)                 # leading-dim split, tile-aligned

    whh = whh_ref[...]                                  # (H, GW) loop-invariant
    bhh = bhh_ref[...]                                  # (1, GW)

    def step(s, h):
        # one fused recurrent matmul per step: single MXU push/pop of (Bp,H)x(H,GW)
        hrzn = jnp.dot(h, whh, preferred_element_type=jnp.float32) + bhh   # (Bp, GW)
        gi_t = gi_scr[s]                                                   # (Bp, GW) vld
        # packed r|z sigmoid: one EUP pass over the whole vreg (n/pad lanes unused)
        rz = jax.nn.sigmoid(gi_t + hrzn)
        r = rz[:, 0:H]
        z = rz[:, H:2 * H]
        # n needs r, so it gets its own (second and last) EUP pass
        n = jnp.tanh(gi_t[:, 2 * H:3 * H] + r * hrzn[:, 2 * H:3 * H])
        return (1.0 - z) * n + z * h

    h = jax.lax.fori_loop(0, T, step, jnp.zeros((Bp, H), jnp.float32), unroll=True)

    # ---- hiddens_to_output: Linear(H,H) -> ReLU -> Linear(H, D_out_pad) ----
    hid = jnp.maximum(
        jnp.dot(h, w1_ref[...], preferred_element_type=jnp.float32) + b1_ref[...],
        0.0)
    o_ref[...] = (jnp.dot(hid, w2_ref[...], preferred_element_type=jnp.float32)
                  + b2_ref[...])


def encoder_forward(data, params):
    """data: (B, T, D_in) float32. Returns (B, output_dim) float32."""
    B, T, D_in = data.shape
    H, GW = params["whh"].shape
    D_out = params["w2_T"].shape[1]

    # --- wrapper-side layout plumbing (free XLA metadata / tiny copies) ---
    Bp = ((B + SUBLANE - 1) // SUBLANE) * SUBLANE        # sublane-pad batch
    if Bp != B:
        data = jnp.pad(data, ((0, Bp - B), (0, 0), (0, 0)))
    # reverse time, go time-major, merge (T, Bp) rows -> (T*Bp, D_in)
    x_tm = jnp.transpose(data, (1, 0, 2))[::-1].reshape(T * Bp, D_in)

    # lane-dense output head: pad D_out up to a multiple of 128, slice back after
    D_out_pad = ((D_out + LANE - 1) // LANE) * LANE
    w2p = jnp.zeros((H, D_out_pad), jnp.float32).at[:, :D_out].set(params["w2_T"])
    b2p = jnp.zeros((1, D_out_pad), jnp.float32).at[:, :D_out].set(params["b2"])

    vmem = pl.BlockSpec(memory_space=pltpu.MemorySpace.VMEM)

    out = pl.pallas_call(
        encoder_kernel,
        out_shape=jax.ShapeDtypeStruct((Bp, D_out_pad), jnp.float32),
        in_specs=[vmem] * 9,
        out_specs=vmem,
        scratch_shapes=[pltpu.VMEM((T, Bp, GW), jnp.float32)],
        compiler_params=pltpu.CompilerParams(vmem_limit_bytes=32 * 1024 * 1024),
        # No grid: single invocation, everything VMEM resident. At production sizes
        # add a parallel batch grid axis (2 TCs on v7x) and bf16 weights.
    )(x_tm, params["wih"], params["whh"], params["bih"], params["bhh"],
      params["w1_T"], params["b1"], w2p, b2p)

    return out[:B, :D_out]


def make_params(key, input_dim, hidden_dim, output_dim, init_std=0.001):
    """Matches PyTorch Encoder init; packs GRU weights gate-fused [r|z|n|0-pad]."""
    k = jax.random.split(key, 6)
    H = hidden_dim
    bound = 1.0 / (H ** 0.5)                      # PyTorch GRU default init
    GW = ((3 * H + LANE - 1) // LANE) * LANE      # lane-padded fused gate width

    w_ih = jax.random.uniform(k[0], (3 * H, input_dim), minval=-bound, maxval=bound,
                              dtype=jnp.float32)
    w_hh = jax.random.uniform(k[1], (3 * H, H), minval=-bound, maxval=bound,
                              dtype=jnp.float32)
    b_ih = jax.random.uniform(k[2], (3 * H,), minval=-bound, maxval=bound,
                              dtype=jnp.float32)
    b_hh = jax.random.uniform(k[3], (3 * H,), minval=-bound, maxval=bound,
                              dtype=jnp.float32)

    # hiddens_to_output: normal(std=INIT_STD) weights, zero bias
    w1 = init_std * jax.random.normal(k[4], (H, H), jnp.float32)
    w2 = init_std * jax.random.normal(k[5], (output_dim, H), jnp.float32)

    # Fused packing: columns [W_r^T | W_z^T | W_n^T | zeros] so the kernel does a
    # single x @ wih / h @ whh per pass.
    wih = jnp.zeros((input_dim, GW), jnp.float32).at[:, :3 * H].set(w_ih.T)
    whh = jnp.zeros((H, GW), jnp.float32).at[:, :3 * H].set(w_hh.T)
    bih = jnp.zeros((1, GW), jnp.float32).at[0, :3 * H].set(b_ih)
    bhh = jnp.zeros((1, GW), jnp.float32).at[0, :3 * H].set(b_hh)

    return {
        "wih": wih, "whh": whh, "bih": bih, "bhh": bhh,
        "w1_T": w1.T,                            # (H, H)
        "b1": jnp.zeros((1, H), jnp.float32),
        "w2_T": w2.T,                            # (H, D_out)
        "b2": jnp.zeros((1, output_dim), jnp.float32),
    }


def encoder_reference(data, params):
    """Pure-JAX reference of the PyTorch Encoder forward, same packed params."""
    B, T, D_in = data.shape
    H = params["whh"].shape[0]
    hp = jax.lax.Precision.HIGHEST
    wih = params["wih"][:, :3 * H]
    whh = params["whh"][:, :3 * H]
    bih = params["bih"][0, :3 * H]
    bhh = params["bhh"][0, :3 * H]
    h = jnp.zeros((B, H), jnp.float32)
    for s in range(T):
        t = T - 1 - s                            # reversed-sequence GRU
        gi = jnp.dot(data[:, t, :], wih, precision=hp) + bih
        gh = jnp.dot(h, whh, precision=hp) + bhh
        r = jax.nn.sigmoid(gi[:, :H] + gh[:, :H])
        z = jax.nn.sigmoid(gi[:, H:2 * H] + gh[:, H:2 * H])
        n = jnp.tanh(gi[:, 2 * H:] + r * gh[:, 2 * H:])
        h = (1.0 - z) * n + z * h
    hid = jnp.maximum(jnp.dot(h, params["w1_T"], precision=hp) + params["b1"], 0.0)
    return jnp.dot(hid, params["w2_T"], precision=hp) + params["b2"]


if __name__ == "__main__":
    batch, seq, input_dim, hidden_dim, output_dim = 4, 8, 8, 32, 16

    key = jax.random.PRNGKey(0)
    k_data, k_params = jax.random.split(key)
    data = jax.random.normal(k_data, (batch, seq, input_dim), jnp.float32)
    params = make_params(k_params, input_dim, hidden_dim, output_dim)

    out = jax.jit(encoder_forward)(data, params)
    jax.block_until_ready(out)
    assert out.shape == (batch, output_dim)

    ref = encoder_reference(data, params)
    assert jnp.allclose(out, ref, rtol=5e-2, atol=2e-6), "kernel mismatch vs reference"

    print("KERNEL_OK")
</pallas_src>

<mosaic_0001>
module attributes {stable_mosaic.version = 11 : i64} {
  func.func @encoder_kernel(%arg0: memref<64x8xf32, #tpu.memory_space<vmem>>, %arg1: memref<8x128xf32, #tpu.memory_space<vmem>>, %arg2: memref<32x128xf32, #tpu.memory_space<vmem>>, %arg3: memref<1x128xf32, #tpu.memory_space<vmem>>, %arg4: memref<1x128xf32, #tpu.memory_space<vmem>>, %arg5: memref<32x32xf32, #tpu.memory_space<vmem>>, %arg6: memref<1x32xf32, #tpu.memory_space<vmem>>, %arg7: memref<32x128xf32, #tpu.memory_space<vmem>>, %arg8: memref<1x128xf32, #tpu.memory_space<vmem>>, %arg9: memref<8x128xf32, #tpu.memory_space<vmem>>, %arg10: memref<8x8x128xf32, #tpu.memory_space<vmem>>) attributes {dimension_semantics = [], scalar_prefetch = 0 : i64, scratch_operands = 1 : i64, tpu.core_type = #tpu.core_type<tc>} {
    %c0 = arith.constant 0 : index
    %c0_0 = arith.constant 0 : index
    %0 = vector.load %arg0[%c0, %c0_0] : memref<64x8xf32, #tpu.memory_space<vmem>>, vector<64x8xf32>
    %c0_1 = arith.constant 0 : index
    %c0_2 = arith.constant 0 : index
    %1 = vector.load %arg1[%c0_1, %c0_2] : memref<8x128xf32, #tpu.memory_space<vmem>>, vector<8x128xf32>
    %cst = arith.constant dense<0.000000e+00> : vector<64x128xf32>
    %2 = tpu.matmul %0, %1, %cst {dimension_numbers = #tpu.dot_dimension_numbers<[1], [0], [0], [1], [0, 0, 1, 1], [], []>} : vector<64x8xf32>, vector<8x128xf32>, vector<64x128xf32> -> vector<64x128xf32>
    %c0_3 = arith.constant 0 : index
    %c0_4 = arith.constant 0 : index
    %3 = vector.load %arg3[%c0_3, %c0_4] : memref<1x128xf32, #tpu.memory_space<vmem>>, vector<1x128xf32>
    %4 = vector.broadcast %3 : vector<1x128xf32> to vector<64x128xf32>
    %5 = arith.addf %2, %4 : vector<64x128xf32>
    %6 = vector.shape_cast %5 : vector<64x128xf32> to vector<8x8x128xf32>
    %c0_5 = arith.constant 0 : index
    %c0_6 = arith.constant 0 : index
    %c0_7 = arith.constant 0 : index
    %7 = vector.load %arg10[%c0_5, %c0_6, %c0_7] : memref<8x8x128xf32, #tpu.memory_space<vmem>>, vector<8x8x128xf32>
    tpu.vector_store %arg10[%c0_5, %c0_6, %c0_7], %6 {strides = array<i32>} : memref<8x8x128xf32, #tpu.memory_space<vmem>>, vector<8x8x128xf32>,
    %c0_8 = arith.constant 0 : index
    %c0_9 = arith.constant 0 : index
    %8 = vector.load %arg2[%c0_8, %c0_9] : memref<32x128xf32, #tpu.memory_space<vmem>>, vector<32x128xf32>
    %c0_10 = arith.constant 0 : index
    %c0_11 = arith.constant 0 : index
    %9 = vector.load %arg4[%c0_10, %c0_11] : memref<1x128xf32, #tpu.memory_space<vmem>>, vector<1x128xf32>
    %cst_12 = arith.constant 0.000000e+00 : f32
    %10 = vector.broadcast %cst_12 : f32 to vector<8x32xf32>
    %c0_i32 = arith.constant 0 : i32
    %cst_13 = arith.constant dense<0.000000e+00> : vector<8x128xf32>
    %11 = tpu.matmul %10, %8, %cst_13 {dimension_numbers = #tpu.dot_dimension_numbers<[1], [0], [0], [1], [0, 0, 1, 1], [], []>} : vector<8x32xf32>, vector<32x128xf32>, vector<8x128xf32> -> vector<8x128xf32>
    %12 = vector.broadcast %9 : vector<1x128xf32> to vector<8x128xf32>
    %13 = arith.addf %11, %12 : vector<8x128xf32>
    %14 = arith.index_cast %c0_i32 : i32 to index
    %c0_14 = arith.constant 0 : index
    %c0_15 = arith.constant 0 : index
    %15 = vector.load %arg10[%14, %c0_14, %c0_15] : memref<8x8x128xf32, #tpu.memory_space<vmem>>, vector<1x8x128xf32>
    %16 = vector.shape_cast %15 : vector<1x8x128xf32> to vector<8x128xf32>
    %17 = arith.addf %16, %13 : vector<8x128xf32>
    %18 = arith.negf %17 : vector<8x128xf32>
    %19 = math.exp %18 : vector<8x128xf32>
    %cst_16 = arith.constant 1.000000e+00 : f32
    %20 = vector.broadcast %cst_16 : f32 to vector<8x128xf32>
    %21 = arith.addf %20, %19 : vector<8x128xf32>
    %22 = arith.divf %20, %21 : vector<8x128xf32>
    %23 = vector.extract_strided_slice %22 {offsets = [0, 0], sizes = [8, 32], strides = [1, 1]} : vector<8x128xf32> to vector<8x32xf32>
    %24 = vector.extract_strided_slice %22 {offsets = [0, 32], sizes = [8, 32], strides = [1, 1]} : vector<8x128xf32> to vector<8x32xf32>
    %25 = vector.extract_strided_slice %16 {offsets = [0, 64], sizes = [8, 32], strides = [1, 1]} : vector<8x128xf32> to vector<8x32xf32>
    %26 = vector.extract_strided_slice %13 {offsets = [0, 64], sizes = [8, 32], strides = [1, 1]} : vector<8x128xf32> to vector<8x32xf32>
    %27 = arith.mulf %23, %26 : vector<8x32xf32>
    %28 = arith.addf %25, %27 : vector<8x32xf32>
    %29 = math.tanh %28 : vector<8x32xf32>
    %cst_17 = arith.constant 1.000000e+00 : f32
    %30 = vector.broadcast %cst_17 : f32 to vector<8x32xf32>
    %31 = arith.subf %30, %24 : vector<8x32xf32>
    %32 = arith.mulf %31, %29 : vector<8x32xf32>
    %33 = arith.mulf %24, %10 : vector<8x32xf32>
    %34 = arith.addf %32, %33 : vector<8x32xf32>
    %c1_i32 = arith.constant 1 : i32
    %cst_18 = arith.constant dense<0.000000e+00> : vector<8x128xf32>
    %35 = tpu.matmul %34, %8, %cst_18 {dimension_numbers = #tpu.dot_dimension_numbers<[1], [0], [0], [1], [0, 0, 1, 1], [], []>} : vector<8x32xf32>, vector<32x128xf32>, vector<8x128xf32> -> vector<8x128xf32>
    %36 = vector.broadcast %9 : vector<1x128xf32> to vector<8x128xf32>
    %37 = arith.addf %35, %36 : vector<8x128xf32>
    %38 = arith.index_cast %c1_i32 : i32 to index
    %c0_19 = arith.constant 0 : index
    %c0_20 = arith.constant 0 : index
    %39 = vector.load %arg10[%38, %c0_19, %c0_20] : memref<8x8x128xf32, #tpu.memory_space<vmem>>, vector<1x8x128xf32>
    %40 = vector.shape_cast %39 : vector<1x8x128xf32> to vector<8x128xf32>
    %41 = arith.addf %40, %37 : vector<8x128xf32>
    %42 = arith.negf %41 : vector<8x128xf32>
    %43 = math.exp %42 : vector<8x128xf32>
    %cst_21 = arith.constant 1.000000e+00 : f32
    %44 = vector.broadcast %cst_21 : f32 to vector<8x128xf32>
    %45 = arith.addf %44, %43 : vector<8x128xf32>
    %46 = arith.divf %44, %45 : vector<8x128xf32>
    %47 = vector.extract_strided_slice %46 {offsets = [0, 0], sizes = [8, 32], strides = [1, 1]} : vector<8x128xf32> to vector<8x32xf32>
    %48 = vector.extract_strided_slice %46 {offsets = [0, 32], sizes = [8, 32], strides = [1, 1]} : vector<8x128xf32> to vector<8x32xf32>
    %49 = vector.extract_strided_slice %40 {offsets = [0, 64], sizes = [8, 32], strides = [1, 1]} : vector<8x128xf32> to vector<8x32xf32>
    %50 = vector.extract_strided_slice %37 {offsets = [0, 64], sizes = [8, 32], strides = [1, 1]} : vector<8x128xf32> to vector<8x32xf32>
    %51 = arith.mulf %47, %50 : vector<8x32xf32>
    %52 = arith.addf %49, %51 : vector<8x32xf32>
    %53 = math.tanh %52 : vector<8x32xf32>
    %cst_22 = arith.constant 1.000000e+00 : f32
    %54 = vector.broadcast %cst_22 : f32 to vector<8x32xf32>
    %55 = arith.subf %54, %48 : vector<8x32xf32>
    %56 = arith.mulf %55, %53 : vector<8x32xf32>
    %57 = arith.mulf %48, %34 : vector<8x32xf32>
    %58 = arith.addf %56, %57 : vector<8x32xf32>
    %c2_i32 = arith.constant 2 : i32
    %cst_23 = arith.constant dense<0.000000e+00> : vector<8x128xf32>
    %59 = tpu.matmul %58, %8, %cst_23 {dimension_numbers = #tpu.dot_dimension_numbers<[1], [0], [0], [1], [0, 0, 1, 1], [], []>} : vector<8x32xf32>, vector<32x128xf32>, vector<8x128xf32> -> vector<8x128xf32>
    %60 = vector.broadcast %9 : vector<1x128xf32> to vector<8x128xf32>
    %61 = arith.addf %59, %60 : vector<8x128xf32>
    %62 = arith.index_cast %c2_i32 : i32 to index
    %c0_24 = arith.constant 0 : index
    %c0_25 = arith.constant 0 : index
    %63 = vector.load %arg10[%62, %c0_24, %c0_25] : memref<8x8x128xf32, #tpu.memory_space<vmem>>, vector<1x8x128xf32>
    %64 = vector.shape_cast %63 : vector<1x8x128xf32> to vector<8x128xf32>
    %65 = arith.addf %64, %61 : vector<8x128xf32>
    %66 = arith.negf %65 : vector<8x128xf32>
    %67 = math.exp %66 : vector<8x128xf32>
    %cst_26 = arith.constant 1.000000e+00 : f32
    %68 = vector.broadcast %cst_26 : f32 to vector<8x128xf32>
    %69 = arith.addf %68, %67 : vector<8x128xf32>
    %70 = arith.divf %68, %69 : vector<8x128xf32>
    %71 = vector.extract_strided_slice %70 {offsets = [0, 0], sizes = [8, 32], strides = [1, 1]} : vector<8x128xf32> to vector<8x32xf32>
    %72 = vector.extract_strided_slice %70 {offsets = [0, 32], sizes = [8, 32], strides = [1, 1]} : vector<8x128xf32> to vector<8x32xf32>
    %73 = vector.extract_strided_slice %64 {offsets = [0, 64], sizes = [8, 32], strides = [1, 1]} : vector<8x128xf32> to vector<8x32xf32>
    %74 = vector.extract_strided_slice %61 {offsets = [0, 64], sizes = [8, 32], strides = [1, 1]} : vector<8x128xf32> to vector<8x32xf32>
    %75 = arith.mulf %71, %74 : vector<8x32xf32>
    %76 = arith.addf %73, %75 : vector<8x32xf32>
    %77 = math.tanh %76 : vector<8x32xf32>
    %cst_27 = arith.constant 1.000000e+00 : f32
    %78 = vector.broadcast %cst_27 : f32 to vector<8x32xf32>
    %79 = arith.subf %78, %72 : vector<8x32xf32>
    %80 = arith.mulf %79, %77 : vector<8x32xf32>
    %81 = arith.mulf %72, %58 : vector<8x32xf32>
    %82 = arith.addf %80, %81 : vector<8x32xf32>
    %c3_i32 = arith.constant 3 : i32
    %cst_28 = arith.constant dense<0.000000e+00> : vector<8x128xf32>
    %83 = tpu.matmul %82, %8, %cst_28 {dimension_numbers = #tpu.dot_dimension_numbers<[1], [0], [0], [1], [0, 0, 1, 1], [], []>} : vector<8x32xf32>, vector<32x128xf32>, vector<8x128xf32> -> vector<8x128xf32>
    %84 = vector.broadcast %9 : vector<1x128xf32> to vector<8x128xf32>
    %85 = arith.addf %83, %84 : vector<8x128xf32>
    %86 = arith.index_cast %c3_i32 : i32 to index
    %c0_29 = arith.constant 0 : index
    %c0_30 = arith.constant 0 : index
    %87 = vector.load %arg10[%86, %c0_29, %c0_30] : memref<8x8x128xf32, #tpu.memory_space<vmem>>, vector<1x8x128xf32>
    %88 = vector.shape_cast %87 : vector<1x8x128xf32> to vector<8x128xf32>
    %89 = arith.addf %88, %85 : vector<8x128xf32>
    %90 = arith.negf %89 : vector<8x128xf32>
    %91 = math.exp %90 : vector<8x128xf32>
    %cst_31 = arith.constant 1.000000e+00 : f32
    %92 = vector.broadcast %cst_31 : f32 to vector<8x128xf32>
    %93 = arith.addf %92, %91 : vector<8x128xf32>
    %94 = arith.divf %92, %93 : vector<8x128xf32>
    %95 = vector.extract_strided_slice %94 {offsets = [0, 0], sizes = [8, 32], strides = [1, 1]} : vector<8x128xf32> to vector<8x32xf32>
    %96 = vector.extract_strided_slice %94 {offsets = [0, 32], sizes = [8, 32], strides = [1, 1]} : vector<8x128xf32> to vector<8x32xf32>
    %97 = vector.extract_strided_slice %88 {offsets = [0, 64], sizes = [8, 32], strides = [1, 1]} : vector<8x128xf32> to vector<8x32xf32>
    %98 = vector.extract_strided_slice %85 {offsets = [0, 64], sizes = [8, 32], strides = [1, 1]} : vector<8x128xf32> to vector<8x32xf32>
    %99 = arith.mulf %95, %98 : vector<8x32xf32>
    %100 = arith.addf %97, %99 : vector<8x32xf32>
    %101 = math.tanh %100 : vector<8x32xf32>
    %cst_32 = arith.constant 1.000000e+00 : f32
    %102 = vector.broadcast %cst_32 : f32 to vector<8x32xf32>
    %103 = arith.subf %102, %96 : vector<8x32xf32>
    %104 = arith.mulf %103, %101 : vector<8x32xf32>
    %105 = arith.mulf %96, %82 : vector<8x32xf32>
    %106 = arith.addf %104, %105 : vector<8x32xf32>
    %c4_i32 = arith.constant 4 : i32
    %cst_33 = arith.constant dense<0.000000e+00> : vector<8x128xf32>
    %107 = tpu.matmul %106, %8, %cst_33 {dimension_numbers = #tpu.dot_dimension_numbers<[1], [0], [0], [1], [0, 0, 1, 1], [], []>} : vector<8x32xf32>, vector<32x128xf32>, vector<8x128xf32> -> vector<8x128xf32>
    %108 = vector.broadcast %9 : vector<1x128xf32> to vector<8x128xf32>
    %109 = arith.addf %107, %108 : vector<8x128xf32>
    %110 = arith.index_cast %c4_i32 : i32 to index
    %c0_34 = arith.constant 0 : index
    %c0_35 = arith.constant 0 : index
    %111 = vector.load %arg10[%110, %c0_34, %c0_35] : memref<8x8x128xf32, #tpu.memory_space<vmem>>, vector<1x8x128xf32>
    %112 = vector.shape_cast %111 : vector<1x8x128xf32> to vector<8x128xf32>
    %113 = arith.addf %112, %109 : vector<8x128xf32>
    %114 = arith.negf %113 : vector<8x128xf32>
    %115 = math.exp %114 : vector<8x128xf32>
    %cst_36 = arith.constant 1.000000e+00 : f32
    %116 = vector.broadcast %cst_36 : f32 to vector<8x128xf32>
    %117 = arith.addf %116, %115 : vector<8x128xf32>
    %118 = arith.divf %116, %117 : vector<8x128xf32>
    %119 = vector.extract_strided_slice %118 {offsets = [0, 0], sizes = [8, 32], strides = [1, 1]} : vector<8x128xf32> to vector<8x32xf32>
    %120 = vector.extract_strided_slice %118 {offsets = [0, 32], sizes = [8, 32], strides = [1, 1]} : vector<8x128xf32> to vector<8x32xf32>
    %121 = vector.extract_strided_slice %112 {offsets = [0, 64], sizes = [8, 32], strides = [1, 1]} : vector<8x128xf32> to vector<8x32xf32>
    %122 = vector.extract_strided_slice %109 {offsets = [0, 64], sizes = [8, 32], strides = [1, 1]} : vector<8x128xf32> to vector<8x32xf32>
    %123 = arith.mulf %119, %122 : vector<8x32xf32>
    %124 = arith.addf %121, %123 : vector<8x32xf32>
    %125 = math.tanh %124 : vector<8x32xf32>
    %cst_37 = arith.constant 1.000000e+00 : f32
    %126 = vector.broadcast %cst_37 : f32 to vector<8x32xf32>
    %127 = arith.subf %126, %120 : vector<8x32xf32>
    %128 = arith.mulf %127, %125 : vector<8x32xf32>
    %129 = arith.mulf %120, %106 : vector<8x32xf32>
    %130 = arith.addf %128, %129 : vector<8x32xf32>
    %c5_i32 = arith.constant 5 : i32
    %cst_38 = arith.constant dense<0.000000e+00> : vector<8x128xf32>
    %131 = tpu.matmul %130, %8, %cst_38 {dimension_numbers = #tpu.dot_dimension_numbers<[1], [0], [0], [1], [0, 0, 1, 1], [], []>} : vector<8x32xf32>, vector<32x128xf32>, vector<8x128xf32> -> vector<8x128xf32>
    %132 = vector.broadcast %9 : vector<1x128xf32> to vector<8x128xf32>
    %133 = arith.addf %131, %132 : vector<8x128xf32>
    %134 = arith.index_cast %c5_i32 : i32 to index
    %c0_39 = arith.constant 0 : index
    %c0_40 = arith.constant 0 : index
    %135 = vector.load %arg10[%134, %c0_39, %c0_40] : memref<8x8x128xf32, #tpu.memory_space<vmem>>, vector<1x8x128xf32>
    %136 = vector.shape_cast %135 : vector<1x8x128xf32> to vector<8x128xf32>
    %137 = arith.addf %136, %133 : vector<8x128xf32>
    %138 = arith.negf %137 : vector<8x128xf32>
    %139 = math.exp %138 : vector<8x128xf32>
    %cst_41 = arith.constant 1.000000e+00 : f32
    %140 = vector.broadcast %cst_41 : f32 to vector<8x128xf32>
    %141 = arith.addf %140, %139 : vector<8x128xf32>
    %142 = arith.divf %140, %141 : vector<8x128xf32>
    %143 = vector.extract_strided_slice %142 {offsets = [0, 0], sizes = [8, 32], strides = [1, 1]} : vector<8x128xf32> to vector<8x32xf32>
    %144 = vector.extract_strided_slice %142 {offsets = [0, 32], sizes = [8, 32], strides = [1, 1]} : vector<8x128xf32> to vector<8x32xf32>
    %145 = vector.extract_strided_slice %136 {offsets = [0, 64], sizes = [8, 32], strides = [1, 1]} : vector<8x128xf32> to vector<8x32xf32>
    %146 = vector.extract_strided_slice %133 {offsets = [0, 64], sizes = [8, 32], strides = [1, 1]} : vector<8x128xf32> to vector<8x32xf32>
    %147 = arith.mulf %143, %146 : vector<8x32xf32>
    %148 = arith.addf %145, %147 : vector<8x32xf32>
    %149 = math.tanh %148 : vector<8x32xf32>
    %cst_42 = arith.constant 1.000000e+00 : f32
    %150 = vector.broadcast %cst_42 : f32 to vector<8x32xf32>
    %151 = arith.subf %150, %144 : vector<8x32xf32>
    %152 = arith.mulf %151, %149 : vector<8x32xf32>
    %153 = arith.mulf %144, %130 : vector<8x32xf32>
    %154 = arith.addf %152, %153 : vector<8x32xf32>
    %c6_i32 = arith.constant 6 : i32
    %cst_43 = arith.constant dense<0.000000e+00> : vector<8x128xf32>
    %155 = tpu.matmul %154, %8, %cst_43 {dimension_numbers = #tpu.dot_dimension_numbers<[1], [0], [0], [1], [0, 0, 1, 1], [], []>} : vector<8x32xf32>, vector<32x128xf32>, vector<8x128xf32> -> vector<8x128xf32>
    %156 = vector.broadcast %9 : vector<1x128xf32> to vector<8x128xf32>
    %157 = arith.addf %155, %156 : vector<8x128xf32>
    %158 = arith.index_cast %c6_i32 : i32 to index
    %c0_44 = arith.constant 0 : index
    %c0_45 = arith.constant 0 : index
    %159 = vector.load %arg10[%158, %c0_44, %c0_45] : memref<8x8x128xf32, #tpu.memory_space<vmem>>, vector<1x8x128xf32>
    %160 = vector.shape_cast %159 : vector<1x8x128xf32> to vector<8x128xf32>
    %161 = arith.addf %160, %157 : vector<8x128xf32>
    %162 = arith.negf %161 : vector<8x128xf32>
    %163 = math.exp %162 : vector<8x128xf32>
    %cst_46 = arith.constant 1.000000e+00 : f32
    %164 = vector.broadcast %cst_46 : f32 to vector<8x128xf32>
    %165 = arith.addf %164, %163 : vector<8x128xf32>
    %166 = arith.divf %164, %165 : vector<8x128xf32>
    %167 = vector.extract_strided_slice %166 {offsets = [0, 0], sizes = [8, 32], strides = [1, 1]} : vector<8x128xf32> to vector<8x32xf32>
    %168 = vector.extract_strided_slice %166 {offsets = [0, 32], sizes = [8, 32], strides = [1, 1]} : vector<8x128xf32> to vector<8x32xf32>
    %169 = vector.extract_strided_slice %160 {offsets = [0, 64], sizes = [8, 32], strides = [1, 1]} : vector<8x128xf32> to vector<8x32xf32>
    %170 = vector.extract_strided_slice %157 {offsets = [0, 64], sizes = [8, 32], strides = [1, 1]} : vector<8x128xf32> to vector<8x32xf32>
    %171 = arith.mulf %167, %170 : vector<8x32xf32>
    %172 = arith.addf %169, %171 : vector<8x32xf32>
    %173 = math.tanh %172 : vector<8x32xf32>
    %cst_47 = arith.constant 1.000000e+00 : f32
    %174 = vector.broadcast %cst_47 : f32 to vector<8x32xf32>
    %175 = arith.subf %174, %168 : vector<8x32xf32>
    %176 = arith.mulf %175, %173 : vector<8x32xf32>
    %177 = arith.mulf %168, %154 : vector<8x32xf32>
    %178 = arith.addf %176, %177 : vector<8x32xf32>
    %c7_i32 = arith.constant 7 : i32
    %cst_48 = arith.constant dense<0.000000e+00> : vector<8x128xf32>
    %179 = tpu.matmul %178, %8, %cst_48 {dimension_numbers = #tpu.dot_dimension_numbers<[1], [0], [0], [1], [0, 0, 1, 1], [], []>} : vector<8x32xf32>, vector<32x128xf32>, vector<8x128xf32> -> vector<8x128xf32>
    %180 = vector.broadcast %9 : vector<1x128xf32> to vector<8x128xf32>
    %181 = arith.addf %179, %180 : vector<8x128xf32>
    %182 = arith.index_cast %c7_i32 : i32 to index
    %c0_49 = arith.constant 0 : index
    %c0_50 = arith.constant 0 : index
    %183 = vector.load %arg10[%182, %c0_49, %c0_50] : memref<8x8x128xf32, #tpu.memory_space<vmem>>, vector<1x8x128xf32>
    %184 = vector.shape_cast %183 : vector<1x8x128xf32> to vector<8x128xf32>
    %185 = arith.addf %184, %181 : vector<8x128xf32>
    %186 = arith.negf %185 : vector<8x128xf32>
    %187 = math.exp %186 : vector<8x128xf32>
    %cst_51 = arith.constant 1.000000e+00 : f32
    %188 = vector.broadcast %cst_51 : f32 to vector<8x128xf32>
    %189 = arith.addf %188, %187 : vector<8x128xf32>
    %190 = arith.divf %188, %189 : vector<8x128xf32>
    %191 = vector.extract_strided_slice %190 {offsets = [0, 0], sizes = [8, 32], strides = [1, 1]} : vector<8x128xf32> to vector<8x32xf32>
    %192 = vector.extract_strided_slice %190 {offsets = [0, 32], sizes = [8, 32], strides = [1, 1]} : vector<8x128xf32> to vector<8x32xf32>
    %193 = vector.extract_strided_slice %184 {offsets = [0, 64], sizes = [8, 32], strides = [1, 1]} : vector<8x128xf32> to vector<8x32xf32>
    %194 = vector.extract_strided_slice %181 {offsets = [0, 64], sizes = [8, 32], strides = [1, 1]} : vector<8x128xf32> to vector<8x32xf32>
    %195 = arith.mulf %191, %194 : vector<8x32xf32>
    %196 = arith.addf %193, %195 : vector<8x32xf32>
    %197 = math.tanh %196 : vector<8x32xf32>
    %cst_52 = arith.constant 1.000000e+00 : f32
    %198 = vector.broadcast %cst_52 : f32 to vector<8x32xf32>
    %199 = arith.subf %198, %192 : vector<8x32xf32>
    %200 = arith.mulf %199, %197 : vector<8x32xf32>
    %201 = arith.mulf %192, %178 : vector<8x32xf32>
    %202 = arith.addf %200, %201 : vector<8x32xf32>
    %c8_i32 = arith.constant 8 : i32
    %c0_53 = arith.constant 0 : index
    %c0_54 = arith.constant 0 : index
    %203 = vector.load %arg5[%c0_53, %c0_54] : memref<32x32xf32, #tpu.memory_space<vmem>>, vector<32x32xf32>
    %cst_55 = arith.constant dense<0.000000e+00> : vector<8x32xf32>
    %204 = tpu.matmul %202, %203, %cst_55 {dimension_numbers = #tpu.dot_dimension_numbers<[1], [0], [0], [1], [0, 0, 1, 1], [], []>} : vector<8x32xf32>, vector<32x32xf32>, vector<8x32xf32> -> vector<8x32xf32>
    %c0_56 = arith.constant 0 : index
    %c0_57 = arith.constant 0 : index
    %205 = vector.load %arg6[%c0_56, %c0_57] : memref<1x32xf32, #tpu.memory_space<vmem>>, vector<1x32xf32>
    %206 = vector.broadcast %205 : vector<1x32xf32> to vector<8x32xf32>
    %207 = arith.addf %204, %206 : vector<8x32xf32>
    %cst_58 = arith.constant 0.000000e+00 : f32
    %208 = vector.broadcast %cst_58 : f32 to vector<8x32xf32>
    %209 = arith.maximumf %207, %208 : vector<8x32xf32>
    %c0_59 = arith.constant 0 : index
    %c0_60 = arith.constant 0 : index
    %210 = vector.load %arg7[%c0_59, %c0_60] : memref<32x128xf32, #tpu.memory_space<vmem>>, vector<32x128xf32>
    %cst_61 = arith.constant dense<0.000000e+00> : vector<8x128xf32>
    %211 = tpu.matmul %209, %210, %cst_61 {dimension_numbers = #tpu.dot_dimension_numbers<[1], [0], [0], [1], [0, 0, 1, 1], [], []>} : vector<8x32xf32>, vector<32x128xf32>, vector<8x128xf32> -> vector<8x128xf32>
    %c0_62 = arith.constant 0 : index
    %c0_63 = arith.constant 0 : index
    %212 = vector.load %arg8[%c0_62, %c0_63] : memref<1x128xf32, #tpu.memory_space<vmem>>, vector<1x128xf32>
    %213 = vector.broadcast %212 : vector<1x128xf32> to vector<8x128xf32>
    %214 = arith.addf %211, %213 : vector<8x128xf32>
    %c0_64 = arith.constant 0 : index
    %c0_65 = arith.constant 0 : index
    %215 = vector.load %arg9[%c0_64, %c0_65] : memref<8x128xf32, #tpu.memory_space<vmem>>, vector<8x128xf32>
    tpu.vector_store %arg9[%c0_64, %c0_65], %214 {strides = array<i32>} : memref<8x128xf32, #tpu.memory_space<vmem>>, vector<8x128xf32>,
    return
  }
}

</mosaic_0001>

<llo_original>
// kernel: encoder_forward.1
$region0: #{encoder_forward.1}
  #allocation0 [shape = 'u32[]', space=smem, size = 0x4, offset = 0x4, fixed_abs, tag = 'smem constant byte address 0x4 - core index']
  #allocation1 [shape = 'u32[144,128]{1,0:T(1,128)}', space=vmem, size = 0x12000, scoped, tag = 'internal scratch']
  #allocation2 [shape = 'f32[8,8,128]{2,1,0:T(8,128)}', space=vmem, size = 0x8000, scoped, tag = 'scratch operand']
  %s0 = inlined_call_operand.vmem [shape: f32[64,8], index: 0, kind: input, shape index: {}]
  %s1 = inlined_call_operand.vmem [shape: f32[8,128], index: 1, kind: input, shape index: {}]
  %s2 = inlined_call_operand.vmem [shape: f32[32,128], index: 2, kind: input, shape index: {}]
  %s3 = inlined_call_operand.vmem [shape: f32[1,128], index: 3, kind: input, shape index: {}]
  %s4 = inlined_call_operand.vmem [shape: f32[1,128], index: 4, kind: input, shape index: {}]
  %s5 = inlined_call_operand.vmem [shape: f32[32,32], index: 5, kind: input, shape index: {}]
  %s6 = inlined_call_operand.vmem [shape: f32[1,32], index: 6, kind: input, shape index: {}]
  %s7 = inlined_call_operand.vmem [shape: f32[32,128], index: 7, kind: input, shape index: {}]
  %s8 = inlined_call_operand.vmem [shape: f32[1,128], index: 8, kind: input, shape index: {}]
  %s9 = inlined_call_operand.vmem [shape: f32[8,128], index: 9, kind: output, shape index: {}]
  %s10 = sld [smem:[#allocation0]]
  $region46: #{encoder_forward.1} parent=0
    _
  %s12 = ssub.s32 1, %s10
  %s13 = scalar_select 0, %s12, %s10
  // Predicated region
  $region2: #{encoder_forward.1} parent=0 // pred_check
    _
  $region3: #{encoder_forward.1} parent=0 // pred_check_branch
    %15 = sbr.rel (0) target = $region5
  $region4: #{encoder_forward.1} parent=0 // pred_region
    _
  $region5: #{encoder_forward.1} parent=0 // pred_fallthru
    _
  // Predicated region
  $region6: #{encoder_forward.1} parent=0 // pred_check
    _
  $region7: #{encoder_forward.1} parent=0 // pred_check_branch
    %17 = sbr.rel (0) target = $region9
  $region8: #{encoder_forward.1} parent=0 // pred_region
    _
  $region9: #{encoder_forward.1} parent=0 // pred_fallthru
    _
  // Predicated region
  $region10: #{encoder_forward.1} parent=0 // pred_check
    _
  $region11: #{encoder_forward.1} parent=0 // pred_check_branch
    %19 = sbr.rel (0) target = $region13
  $region12: #{encoder_forward.1} parent=0 // pred_region
    _
  $region13: #{encoder_forward.1} parent=0 // pred_fallthru
    _
  // Predicated region
  $region14: #{encoder_forward.1} parent=0 // pred_check
    _
  $region15: #{encoder_forward.1} parent=0 // pred_check_branch
    %21 = sbr.rel (0) target = $region17
  $region16: #{encoder_forward.1} parent=0 // pred_region
    _
  $region17: #{encoder_forward.1} parent=0 // pred_fallthru
    _
  // Predicated region
  $region18: #{encoder_forward.1} parent=0 // pred_check
    _
  $region19: #{encoder_forward.1} parent=0 // pred_check_branch
    %23 = sbr.rel (0) target = $region21
  $region20: #{encoder_forward.1} parent=0 // pred_region
    _
  $region21: #{encoder_forward.1} parent=0 // pred_fallthru
    _
  // Predicated region
  $region22: #{encoder_forward.1} parent=0 // pred_check
    _
  $region23: #{encoder_forward.1} parent=0 // pred_check_branch
    %25 = sbr.rel (0) target = $region25
  $region24: #{encoder_forward.1} parent=0 // pred_region
    _
  $region25: #{encoder_forward.1} parent=0 // pred_fallthru
    _
  // Predicated region
  $region26: #{encoder_forward.1} parent=0 // pred_check
    _
  $region27: #{encoder_forward.1} parent=0 // pred_check_branch
    %27 = sbr.rel (0) target = $region29
  $region28: #{encoder_forward.1} parent=0 // pred_region
    _
  $region29: #{encoder_forward.1} parent=0 // pred_fallthru
    _
  // Predicated region
  $region30: #{encoder_forward.1} parent=0 // pred_check
    _
  $region31: #{encoder_forward.1} parent=0 // pred_check_branch
    %29 = sbr.rel (0) target = $region33
  $region32: #{encoder_forward.1} parent=0 // pred_region
    _
  $region33: #{encoder_forward.1} parent=0 // pred_fallthru
    _
  // Predicated region
  $region34: #{encoder_forward.1} parent=0 // pred_check
    _
  $region35: #{encoder_forward.1} parent=0 // pred_check_branch
    %31 = sbr.rel (0) target = $region37
  $region36: #{encoder_forward.1} parent=0 // pred_region
    _
  $region37: #{encoder_forward.1} parent=0 // pred_fallthru
    _
  %v32 = vld [vmem:[%s0] sm:$0xff]
  %v33 = vld [vmem:[%s0 + $0x8] sm:$0xff]
  %v34 = vld [vmem:[%s0 + $0x10] sm:$0xff]
  %v35 = vld [vmem:[%s0 + $0x18] sm:$0xff]
  %v36 = vld [vmem:[%s0 + $0x20] sm:$0xff]
  %v37 = vld [vmem:[%s0 + $0x28] sm:$0xff]
  %v38 = vld [vmem:[%s0 + $0x30] sm:$0xff]
  %v39 = vld [vmem:[%s0 + $0x38] sm:$0xff]
  %v40 = vld [vmem:[%s1] sm:$0xff]
  %v41 = vld [vmem:[%s3] sm:$0x1]
  %v43 = vlaneseq
  %v44 = vshrl.u32 %v43, 7
  %v45 = vsub.s32 0, %v44
  %v46 = vrot.slane %v41, %v45
  %vm48 = vcmask 64512
  %v50 = vsel %vm48, %v32, 0
  %v53 = vsel %vm48, %v33, 0
  %v56 = vsel %vm48, %v34, 0
  %v59 = vsel %vm48, %v35, 0
  %v62 = vsel %vm48, %v36, 0
  %v65 = vsel %vm48, %v37, 0
  %v68 = vsel %vm48, %v38, 0
  %v71 = vsel %vm48, %v39, 0
  %73 = vmatprep.subr.mxu0 0.0
  %74 = vmatpush1.msra.mxu0 %v40
  %75 = vmatprep.subr.mxu0 0.0
  %76 = vmatpush1.msra.mxu0 0.0
  %77 = vmatprep.subr.mxu0 0.0
  %78 = vmatpush1.msra.mxu0 0.0
  %79 = vmatprep.subr.mxu0 0.0
  %80 = vmatpush1.msra.mxu0 0.0
  %81 = vmatprep.subr.mxu0 0.0
  %82 = vmatpush1.msra.mxu0 0.0
  %83 = vmatprep.subr.mxu0 0.0
  %84 = vmatpush1.msra.mxu0 0.0
  %85 = vmatprep.subr.mxu0 0.0
  %86 = vmatpush1.msra.mxu0 0.0
  %87 = vmatprep.subr.mxu0 0.0
  %88 = vmatpush1.msra.mxu0 0.0
  %89 = vmatprep.subr.mxu0 0.0
  %90 = vmatpush1.msra.mxu0 0.0
  %91 = vmatprep.subr.mxu0 0.0
  %92 = vmatpush1.msra.mxu0 0.0
  %93 = vmatprep.subr.mxu0 0.0
  %94 = vmatpush1.msra.mxu0 0.0
  %95 = vmatprep.subr.mxu0 0.0
  %96 = vmatpush1.msra.mxu0 0.0
  %97 = vmatprep.subr.mxu0 0.0
  %98 = vmatpush1.msra.mxu0 0.0
  %99 = vmatprep.subr.mxu0 0.0
  %100 = vmatpush1.msra.mxu0 0.0
  %101 = vmatprep.subr.mxu0 0.0
  %102 = vmatpush1.msra.mxu0 0.0
  %103 = vmatprep.subr.mxu0 0.0
  %104 = vmatpush1.msra.mxu0 0.0
  %105 = vmatprep.subr.mxu0 0.0
  %106 = vmatpush1.msra.mxu0 0.0
  %107 = vmatprep.subr.mxu0 0.0
  %108 = vmatpush1.msra.mxu0 0.0
  %109 = vmatprep.subr.mxu0 0.0
  %110 = vmatpush1.msra.mxu0 0.0
  %111 = vmatprep.subr.mxu0 0.0
  %112 = vmatpush1.msra.mxu0 0.0
  %113 = vmatprep.subr.mxu0 0.0
  %114 = vmatpush1.msra.mxu0 0.0
  %115 = vmatprep.subr.mxu0 0.0
  %116 = vmatpush1.msra.mxu0 0.0
  %117 = vmatprep.subr.mxu0 0.0
  %118 = vmatpush1.msra.mxu0 0.0
  %119 = vmatprep.subr.mxu0 0.0
  %120 = vmatpush1.msra.mxu0 0.0
  %121 = vmatprep.subr.mxu0 0.0
  %122 = vmatpush1.msra.mxu0 0.0
  %123 = vmatprep.subr.mxu0 0.0
  %124 = vmatpush1.msra.mxu0 0.0
  %125 = vmatprep.subr.mxu0 0.0
  %126 = vmatpush1.msra.mxu0 0.0
  %127 = vmatprep.subr.mxu0 0.0
  %128 = vmatpush1.msra.mxu0 0.0
  %129 = vmatprep.subr.mxu0 0.0
  %130 = vmatpush1.msra.mxu0 0.0
  %131 = vmatprep.subr.mxu0 0.0
  %132 = vmatpush1.msra.mxu0 0.0
  %133 = vmatprep.subr.mxu0 0.0
  %134 = vmatpush1.msra.mxu0 0.0
  %135 = vmatprep.subr.mxu0 0.0
  %136 = vmatpush1.msra.mxu0 0.0
  %137 = vmatprep.mubr.f32.mxu0 0.0
  %138 = vmatmul.mubr.f32.gmra.mrb[0].mxu0 %v50
  %v139 = vpop.f32.mrb[0].mxu0
  %v140 = vadd.f32 %v46, %v139
  %v141 = vpop.f32.mrb[0].mxu0
  %142 = vmatprep.mubr.f32.mxu0 0.0
  %143 = vmatmul.mubr.f32.gmra.mrb[0].mxu0 %v53
  %v144 = vpop.f32.mrb[0].mxu0
  %v145 = vadd.f32 %v46, %v144
  %v146 = vpop.f32.mrb[0].mxu0
  %147 = vmatprep.mubr.f32.mxu0 0.0
  %148 = vmatmul.mubr.f32.gmra.mrb[0].mxu0 %v56
  %v149 = vpop.f32.mrb[0].mxu0
  %v150 = vadd.f32 %v46, %v149
  %v151 = vpop.f32.mrb[0].mxu0
  %152 = vmatprep.mubr.f32.mxu0 0.0
  %153 = vmatmul.mubr.f32.gmra.mrb[0].mxu0 %v59
  %v154 = vpop.f32.mrb[0].mxu0
  %v155 = vadd.f32 %v46, %v154
  %v156 = vpop.f32.mrb[0].mxu0
  %157 = vmatprep.mubr.f32.mxu0 0.0
  %158 = vmatmul.mubr.f32.gmra.mrb[0].mxu0 %v62
  %v159 = vpop.f32.mrb[0].mxu0
  %v160 = vadd.f32 %v46, %v159
  %v161 = vpop.f32.mrb[0].mxu0
  %162 = vmatprep.mubr.f32.mxu0 0.0
  %163 = vmatmul.mubr.f32.gmra.mrb[0].mxu0 %v65
  %v164 = vpop.f32.mrb[0].mxu0
  %v165 = vadd.f32 %v46, %v164
  %v166 = vpop.f32.mrb[0].mxu0
  %167 = vmatprep.mubr.f32.mxu0 0.0
  %168 = vmatmul.mubr.f32.gmra.mrb[0].mxu0 %v68
  %v169 = vpop.f32.mrb[0].mxu0
  %v170 = vadd.f32 %v46, %v169
  %v171 = vpop.f32.mrb[0].mxu0
  %172 = vmatprep.mubr.f32.mxu0 0.0
  %173 = vmatmul.mubr.f32.gmra.mrb[0].mxu0 %v71
  %v174 = vpop.f32.mrb[0].mxu0
  %v175 = vadd.f32 %v46, %v174
  %v176 = vpop.f32.mrb[0].mxu0
  %177 = vdwg.mxu0
  %178 = vst [vmem:[#allocation2] sm:$0xff] %v140
  %179 = vst [vmem:[#allocation2 + $0x8] sm:$0xff] %v145
  %180 = vst [vmem:[#allocation2 + $0x10] sm:$0xff] %v150
  %181 = vst [vmem:[#allocation2 + $0x18] sm:$0xff] %v155
  %182 = vst [vmem:[#allocation2 + $0x20] sm:$0xff] %v160
  %183 = vst [vmem:[#allocation2 + $0x28] sm:$0xff] %v165
  %184 = vst [vmem:[#allocation2 + $0x30] sm:$0xff] %v170
  %185 = vst [vmem:[#allocation2 + $0x38] sm:$0xff] %v175
  %v186 = vld [vmem:[%s2] sm:$0xff]
  %v187 = vld [vmem:[%s2 + $0x8] sm:$0xff]
  %v188 = vld [vmem:[%s2 + $0x10] sm:$0xff]
  %v189 = vld [vmem:[%s2 + $0x18] sm:$0xff]
  %v190 = vld [vmem:[%s4] sm:$0x1]
  %v192 = vlaneseq
  %v193 = vshrl.u32 %v192, 7
  %v194 = vsub.s32 0, %v193
  %v195 = vrot.slane %v190, %v194
  %vm197 = vcmask 261120
  %v199 = vsel %vm197, 0.0, 0
  %201 = vmatprep.subr.mxu0 0.0
  %202 = vmatpush1.msra.mxu0 %v186
  %203 = vmatprep.subr.mxu0 0.0
  %204 = vmatpush1.msra.mxu0 %v187
  %205 = vmatprep.subr.mxu0 0.0
  %206 = vmatpush1.msra.mxu0 %v188
  %207 = vmatprep.subr.mxu0 0.0
  %208 = vmatpush1.msra.mxu0 %v189
  %209 = vmatprep.subr.mxu0 0.0
  %210 = vmatpush1.msra.mxu0 0.0
  %211 = vmatprep.subr.mxu0 0.0
  %212 = vmatpush1.msra.mxu0 0.0
  %213 = vmatprep.subr.mxu0 0.0
  %214 = vmatpush1.msra.mxu0 0.0
  %215 = vmatprep.subr.mxu0 0.0
  %216 = vmatpush1.msra.mxu0 0.0
  %217 = vmatprep.subr.mxu0 0.0
  %218 = vmatpush1.msra.mxu0 0.0
  %219 = vmatprep.subr.mxu0 0.0
  %220 = vmatpush1.msra.mxu0 0.0
  %221 = vmatprep.subr.mxu0 0.0
  %222 = vmatpush1.msra.mxu0 0.0
  %223 = vmatprep.subr.mxu0 0.0
  %224 = vmatpush1.msra.mxu0 0.0
  %225 = vmatprep.subr.mxu0 0.0
  %226 = vmatpush1.msra.mxu0 0.0
  %227 = vmatprep.subr.mxu0 0.0
  %228 = vmatpush1.msra.mxu0 0.0
  %229 = vmatprep.subr.mxu0 0.0
  %230 = vmatpush1.msra.mxu0 0.0
  %231 = vmatprep.subr.mxu0 0.0
  %232 = vmatpush1.msra.mxu0 0.0
  %233 = vmatprep.subr.mxu0 0.0
  %234 = vmatpush1.msra.mxu0 0.0
  %235 = vmatprep.subr.mxu0 0.0
  %236 = vmatpush1.msra.mxu0 0.0
  %237 = vmatprep.subr.mxu0 0.0
  %238 = vmatpush1.msra.mxu0 0.0
  %239 = vmatprep.subr.mxu0 0.0
  %240 = vmatpush1.msra.mxu0 0.0
  %241 = vmatprep.subr.mxu0 0.0
  %242 = vmatpush1.msra.mxu0 0.0
  %243 = vmatprep.subr.mxu0 0.0
  %244 = vmatpush1.msra.mxu0 0.0
  %245 = vmatprep.subr.mxu0 0.0
  %246 = vmatpush1.msra.mxu0 0.0
  %247 = vmatprep.subr.mxu0 0.0
  %248 = vmatpush1.msra.mxu0 0.0
  %249 = vmatprep.subr.mxu0 0.0
  %250 = vmatpush1.msra.mxu0 0.0
  %251 = vmatprep.subr.mxu0 0.0
  %252 = vmatpush1.msra.mxu0 0.0
  %253 = vmatprep.subr.mxu0 0.0
  %254 = vmatpush1.msra.mxu0 0.0
  %255 = vmatprep.subr.mxu0 0.0
  %256 = vmatpush1.msra.mxu0 0.0
  %257 = vmatprep.subr.mxu0 0.0
  %258 = vmatpush1.msra.mxu0 0.0
  %259 = vmatprep.subr.mxu0 0.0
  %260 = vmatpush1.msra.mxu0 0.0
  %261 = vmatprep.subr.mxu0 0.0
  %262 = vmatpush1.msra.mxu0 0.0
  %263 = vmatprep.subr.mxu0 0.0
  %264 = vmatpush1.msra.mxu0 0.0
  %265 = vmatprep.mubr.f32.mxu0 0.0
  %266 = vmatmul.mubr.f32.gmra.mrb[0].mxu0 %v199
  %v267 = vpop.f32.mrb[0].mxu0
  %v268 = vadd.f32 %v195, %v267
  %v269 = vpop.f32.mrb[0].mxu0
  %270 = vdwg.mxu0
  %v271 = vld [vmem:[#allocation2] sm:$0xff]
  %v272 = vadd.f32 %v271, %v268
  %v273 = vxor.u32 %v272, 2147483648
  %v274 = vmul.f32 %v273, 1.442695
  %v275 = vpow.pop %v274
  %v276 = vadd.f32 %v275, 1.0
  %v277 = vrcp.pop %v276
  %v278 = vmul.f32 1.0, %v277
  %280 = vrot.lane.b32.xlu0 %v268, 64
  %v281 = vpop.permute.xlu0 %280
  %v283 = vmul.f32 %v278, %v281
  %285 = vrot.lane.b32.xlu0 %v283, 64
  %v286 = vpop.permute.xlu0 %285
  %v288 = vadd.f32 %v271, %v286
  %v289 = vtanh.pop %v288
  %v290 = vsub.f32 1.0, %v278
  %292 = vrot.lane.b32.xlu0 %v289, 96
  %v293 = vpop.permute.xlu0 %292
  %v295 = vmul.f32 %v290, %v293
  %v296 = vmul.f32 %v278, 0.0
  %v297 = vadd.f32 %v295, %v296
  %299 = vrot.lane.b32.xlu0 %v297, 96
  %v300 = vpop.permute.xlu0 %299
  %v301 = vsel %vm197, %v300, 0
  %303 = vmatprep.subr.mxu0 0.0
  %304 = vmatpush1.msra.mxu0 %v186
  %305 = vmatprep.subr.mxu0 0.0
  %306 = vmatpush1.msra.mxu0 %v187
  %307 = vmatprep.subr.mxu0 0.0
  %308 = vmatpush1.msra.mxu0 %v188
  %309 = vmatprep.subr.mxu0 0.0
  %310 = vmatpush1.msra.mxu0 %v189
  %311 = vmatprep.subr.mxu0 0.0
  %312 = vmatpush1.msra.mxu0 0.0
  %313 = vmatprep.subr.mxu0 0.0
  %314 = vmatpush1.msra.mxu0 0.0
  %315 = vmatprep.subr.mxu0 0.0
  %316 = vmatpush1.msra.mxu0 0.0
  %317 = vmatprep.subr.mxu0 0.0
  %318 = vmatpush1.msra.mxu0 0.0
  %319 = vmatprep.subr.mxu0 0.0
  %320 = vmatpush1.msra.mxu0 0.0
  %321 = vmatprep.subr.mxu0 0.0
  %322 = vmatpush1.msra.mxu0 0.0
  %323 = vmatprep.subr.mxu0 0.0
  %324 = vmatpush1.msra.mxu0 0.0
  %325 = vmatprep.subr.mxu0 0.0
  %326 = vmatpush1.msra.mxu0 0.0
  %327 = vmatprep.subr.mxu0 0.0
  %328 = vmatpush1.msra.mxu0 0.0
  %329 = vmatprep.subr.mxu0 0.0
  %330 = vmatpush1.msra.mxu0 0.0
  %331 = vmatprep.subr.mxu0 0.0
  %332 = vmatpush1.msra.mxu0 0.0
  %333 = vmatprep.subr.mxu0 0.0
  %334 = vmatpush1.msra.mxu0 0.0
  %335 = vmatprep.subr.mxu0 0.0
  %336 = vmatpush1.msra.mxu0 0.0
  %337 = vmatprep.subr.mxu0 0.0
  %338 = vmatpush1.msra.mxu0 0.0
  %339 = vmatprep.subr.mxu0 0.0
  %340 = vmatpush1.msra.mxu0 0.0
  %341 = vmatprep.subr.mxu0 0.0
  %342 = vmatpush1.msra.mxu0 0.0
  %343 = vmatprep.subr.mxu0 0.0
  %344 = vmatpush1.msra.mxu0 0.0
  %345 = vmatprep.subr.mxu0 0.0
  %346 = vmatpush1.msra.mxu0 0.0
  %347 = vmatprep.subr.mxu0 0.0
  %348 = vmatpush1.msra.mxu0 0.0
  %349 = vmatprep.subr.mxu0 0.0
  %350 = vmatpush1.msra.mxu0 0.0
  %351 = vmatprep.subr.mxu0 0.0
  %352 = vmatpush1.msra.mxu0 0.0
  %353 = vmatprep.subr.mxu0 0.0
  %354 = vmatpush1.msra.mxu0 0.0
  %355 = vmatprep.subr.mxu0 0.0
  %356 = vmatpush1.msra.mxu0 0.0
  %357 = vmatprep.subr.mxu0 0.0
  %358 = vmatpush1.msra.mxu0 0.0
  %359 = vmatprep.subr.mxu0 0.0
  %360 = vmatpush1.msra.mxu0 0.0
  %361 = vmatprep.subr.mxu0 0.0
  %362 = vmatpush1.msra.mxu0 0.0
  %363 = vmatprep.subr.mxu0 0.0
  %364 = vmatpush1.msra.mxu0 0.0
  %365 = vmatprep.subr.mxu0 0.0
  %366 = vmatpush1.msra.mxu0 0.0
  %367 = vmatprep.mubr.f32.mxu0 0.0
  %368 = vmatmul.mubr.f32.gmra.mrb[0].mxu0 %v301
  %v369 = vpop.f32.mrb[0].mxu0
  %v370 = vadd.f32 %v195, %v369
  %v371 = vpop.f32.mrb[0].mxu0
  %372 = vdwg.mxu0
  %s373 = scalar_lea.vmem [#allocation2], 8
  %v374 = vld [vmem:[%s373] sm:$0xff]
  %v375 = vadd.f32 %v374, %v370
  %v376 = vxor.u32 %v375, 2147483648
  %v377 = vmul.f32 %v376, 1.442695
  %v378 = vpow.pop %v377
  %v379 = vadd.f32 %v378, 1.0
  %v380 = vrcp.pop %v379
  %v381 = vmul.f32 1.0, %v380
  %383 = vrot.lane.b32.xlu0 %v370, 64
  %v384 = vpop.permute.xlu0 %383
  %v386 = vmul.f32 %v381, %v384
  %388 = vrot.lane.b32.xlu0 %v386, 64
  %v389 = vpop.permute.xlu0 %388
  %v391 = vadd.f32 %v374, %v389
  %v392 = vtanh.pop %v391
  %v393 = vsub.f32 1.0, %v381
  %395 = vrot.lane.b32.xlu0 %v392, 96
  %v396 = vpop.permute.xlu0 %395
  %v398 = vmul.f32 %v393, %v396
  %v399 = vmul.f32 %v381, %v297
  %v400 = vadd.f32 %v398, %v399
  %402 = vrot.lane.b32.xlu0 %v400, 96
  %v403 = vpop.permute.xlu0 %402
  %v404 = vsel %vm197, %v403, 0
  %406 = vmatprep.subr.mxu0 0.0
  %407 = vmatpush1.msra.mxu0 %v186
  %408 = vmatprep.subr.mxu0 0.0
  %409 = vmatpush1.msra.mxu0 %v187
  %410 = vmatprep.subr.mxu0 0.0
  %411 = vmatpush1.msra.mxu0 %v188
  %412 = vmatprep.subr.mxu0 0.0
  %413 = vmatpush1.msra.mxu0 %v189
  %414 = vmatprep.subr.mxu0 0.0
  %415 = vmatpush1.msra.mxu0 0.0
  %416 = vmatprep.subr.mxu0 0.0
  %417 = vmatpush1.msra.mxu0 0.0
  %418 = vmatprep.subr.mxu0 0.0
  %419 = vmatpush1.msra.mxu0 0.0
  %420 = vmatprep.subr.mxu0 0.0
  %421 = vmatpush1.msra.mxu0 0.0
  %422 = vmatprep.subr.mxu0 0.0
  %423 = vmatpush1.msra.mxu0 0.0
  %424 = vmatprep.subr.mxu0 0.0
  %425 = vmatpush1.msra.mxu0 0.0
  %426 = vmatprep.subr.mxu0 0.0
  %427 = vmatpush1.msra.mxu0 0.0
  %428 = vmatprep.subr.mxu0 0.0
  %429 = vmatpush1.msra.mxu0 0.0
  %430 = vmatprep.subr.mxu0 0.0
  %431 = vmatpush1.msra.mxu0 0.0
  %432 = vmatprep.subr.mxu0 0.0
  %433 = vmatpush1.msra.mxu0 0.0
  %434 = vmatprep.subr.mxu0 0.0
  %435 = vmatpush1.msra.mxu0 0.0
  %436 = vmatprep.subr.mxu0 0.0
  %437 = vmatpush1.msra.mxu0 0.0
  %438 = vmatprep.subr.mxu0 0.0
  %439 = vmatpush1.msra.mxu0 0.0
  %440 = vmatprep.subr.mxu0 0.0
  %441 = vmatpush1.msra.mxu0 0.0
  %442 = vmatprep.subr.mxu0 0.0
  %443 = vmatpush1.msra.mxu0 0.0
  %444 = vmatprep.subr.mxu0 0.0
  %445 = vmatpush1.msra.mxu0 0.0
  %446 = vmatprep.subr.mxu0 0.0
  %447 = vmatpush1.msra.mxu0 0.0
  %448 = vmatprep.subr.mxu0 0.0
  %449 = vmatpush1.msra.mxu0 0.0
  %450 = vmatprep.subr.mxu0 0.0
  %451 = vmatpush1.msra.mxu0 0.0
  %452 = vmatprep.subr.mxu0 0.0
  %453 = vmatpush1.msra.mxu0 0.0
  %454 = vmatprep.subr.mxu0 0.0
  %455 = vmatpush1.msra.mxu0 0.0
  %456 = vmatprep.subr.mxu0 0.0
  %457 = vmatpush1.msra.mxu0 0.0
  %458 = vmatprep.subr.mxu0 0.0
  %459 = vmatpush1.msra.mxu0 0.0
  %460 = vmatprep.subr.mxu0 0.0
  %461 = vmatpush1.msra.mxu0 0.0
  %462 = vmatprep.subr.mxu0 0.0
  %463 = vmatpush1.msra.mxu0 0.0
  %464 = vmatprep.subr.mxu0 0.0
  %465 = vmatpush1.msra.mxu0 0.0
  %466 = vmatprep.subr.mxu0 0.0
  %467 = vmatpush1.msra.mxu0 0.0
  %468 = vmatprep.subr.mxu0 0.0
  %469 = vmatpush1.msra.mxu0 0.0
  %470 = vmatprep.mubr.f32.mxu0 0.0
  %471 = vmatmul.mubr.f32.gmra.mrb[0].mxu0 %v404
  %v472 = vpop.f32.mrb[0].mxu0
  %v473 = vadd.f32 %v195, %v472
  %v474 = vpop.f32.mrb[0].mxu0
  %475 = vdwg.mxu0
  %s476 = scalar_lea.vmem [#allocation2], 16
  %v477 = vld [vmem:[%s476] sm:$0xff]
  %v478 = vadd.f32 %v477, %v473
  %v479 = vxor.u32 %v478, 2147483648
  %v480 = vmul.f32 %v479, 1.442695
  %v481 = vpow.pop %v480
  %v482 = vadd.f32 %v481, 1.0
  %v483 = vrcp.pop %v482
  %v484 = vmul.f32 1.0, %v483
  %486 = vrot.lane.b32.xlu0 %v473, 64
  %v487 = vpop.permute.xlu0 %486
  %v489 = vmul.f32 %v484, %v487
  %491 = vrot.lane.b32.xlu0 %v489, 64
  %v492 = vpop.permute.xlu0 %491
  %v494 = vadd.f32 %v477, %v492
  %v495 = vtanh.pop %v494
  %v496 = vsub.f32 1.0, %v484
  %498 = vrot.lane.b32.xlu0 %v495, 96
  %v499 = vpop.permute.xlu0 %498
  %v501 = vmul.f32 %v496, %v499
  %v502 = vmul.f32 %v484, %v400
  %v503 = vadd.f32 %v501, %v502
  %505 = vrot.lane.b32.xlu0 %v503, 96
  %v506 = vpop.permute.xlu0 %505
  %v507 = vsel %vm197, %v506, 0
  %509 = vmatprep.subr.mxu0 0.0
  %510 = vmatpush1.msra.mxu0 %v186
  %511 = vmatprep.subr.mxu0 0.0
  %512 = vmatpush1.msra.mxu0 %v187
  %513 = vmatprep.subr.mxu0 0.0
  %514 = vmatpush1.msra.mxu0 %v188
  %515 = vmatprep.subr.mxu0 0.0
  %516 = vmatpush1.msra.mxu0 %v189
  %517 = vmatprep.subr.mxu0 0.0
  %518 = vmatpush1.msra.mxu0 0.0
  %519 = vmatprep.subr.mxu0 0.0
  %520 = vmatpush1.msra.mxu0 0.0
  %521 = vmatprep.subr.mxu0 0.0
  %522 = vmatpush1.msra.mxu0 0.0
  %523 = vmatprep.subr.mxu0 0.0
  %524 = vmatpush1.msra.mxu0 0.0
  %525 = vmatprep.subr.mxu0 0.0
  %526 = vmatpush1.msra.mxu0 0.0
  %527 = vmatprep.subr.mxu0 0.0
  %528 = vmatpush1.msra.mxu0 0.0
  %529 = vmatprep.subr.mxu0 0.0
  %530 = vmatpush1.msra.mxu0 0.0
  %531 = vmatprep.subr.mxu0 0.0
  %532 = vmatpush1.msra.mxu0 0.0
  %533 = vmatprep.subr.mxu0 0.0
  %534 = vmatpush1.msra.mxu0 0.0
  %535 = vmatprep.subr.mxu0 0.0
  %536 = vmatpush1.msra.mxu0 0.0
  %537 = vmatprep.subr.mxu0 0.0
  %538 = vmatpush1.msra.mxu0 0.0
  %539 = vmatprep.subr.mxu0 0.0
  %540 = vmatpush1.msra.mxu0 0.0
  %541 = vmatprep.subr.mxu0 0.0
  %542 = vmatpush1.msra.mxu0 0.0
  %543 = vmatprep.subr.mxu0 0.0
  %544 = vmatpush1.msra.mxu0 0.0
  %545 = vmatprep.subr.mxu0 0.0
  %546 = vmatpush1.msra.mxu0 0.0
  %547 = vmatprep.subr.mxu0 0.0
  %548 = vmatpush1.msra.mxu0 0.0
  %549 = vmatprep.subr.mxu0 0.0
  %550 = vmatpush1.msra.mxu0 0.0
  %551 = vmatprep.subr.mxu0 0.0
  %552 = vmatpush1.msra.mxu0 0.0
  %553 = vmatprep.subr.mxu0 0.0
  %554 = vmatpush1.msra.mxu0 0.0
  %555 = vmatprep.subr.mxu0 0.0
  %556 = vmatpush1.msra.mxu0 0.0
  %557 = vmatprep.subr.mxu0 0.0
  %558 = vmatpush1.msra.mxu0 0.0
  %559 = vmatprep.subr.mxu0 0.0
  %560 = vmatpush1.msra.mxu0 0.0
  %561 = vmatprep.subr.mxu0 0.0
  %562 = vmatpush1.msra.mxu0 0.0
  %563 = vmatprep.subr.mxu0 0.0
  %564 = vmatpush1.msra.mxu0 0.0
  %565 = vmatprep.subr.mxu0 0.0
  %566 = vmatpush1.msra.mxu0 0.0
  %567 = vmatprep.subr.mxu0 0.0
  %568 = vmatpush1.msra.mxu0 0.0
  %569 = vmatprep.subr.mxu0 0.0
  %570 = vmatpush1.msra.mxu0 0.0
  %571 = vmatprep.subr.mxu0 0.0
  %572 = vmatpush1.msra.mxu0 0.0
  %573 = vmatprep.mubr.f32.mxu0 0.0
  %574 = vmatmul.mubr.f32.gmra.mrb[0].mxu0 %v507
  %v575 = vpop.f32.mrb[0].mxu0
  %v576 = vadd.f32 %v195, %v575
  %v577 = vpop.f32.mrb[0].mxu0
  %578 = vdwg.mxu0
  %s579 = scalar_lea.vmem [#allocation2], 24
  %v580 = vld [vmem:[%s579] sm:$0xff]
  %v581 = vadd.f32 %v580, %v576
  %v582 = vxor.u32 %v581, 2147483648
  %v583 = vmul.f32 %v582, 1.442695
  %v584 = vpow.pop %v583
  %v585 = vadd.f32 %v584, 1.0
  %v586 = vrcp.pop %v585
  %v587 = vmul.f32 1.0, %v586
  %589 = vrot.lane.b32.xlu0 %v576, 64
  %v590 = vpop.permute.xlu0 %589
  %v592 = vmul.f32 %v587, %v590
  %594 = vrot.lane.b32.xlu0 %v592, 64
  %v595 = vpop.permute.xlu0 %594
  %v597 = vadd.f32 %v580, %v595
  %v598 = vtanh.pop %v597
  %v599 = vsub.f32 1.0, %v587
  %601 = vrot.lane.b32.xlu0 %v598, 96
  %v602 = vpop.permute.xlu0 %601
  %v604 = vmul.f32 %v599, %v602
  %v605 = vmul.f32 %v587, %v503
  %v606 = vadd.f32 %v604, %v605
  %608 = vrot.lane.b32.xlu0 %v606, 96
  %v609 = vpop.permute.xlu0 %608
  %v610 = vsel %vm197, %v609, 0
  %612 = vmatprep.subr.mxu0 0.0
  %613 = vmatpush1.msra.mxu0 %v186
  %614 = vmatprep.subr.mxu0 0.0
  %615 = vmatpush1.msra.mxu0 %v187
  %616 = vmatprep.subr.mxu0 0.0
  %617 = vmatpush1.msra.mxu0 %v188
  %618 = vmatprep.subr.mxu0 0.0
  %619 = vmatpush1.msra.mxu0 %v189
  %620 = vmatprep.subr.mxu0 0.0
  %621 = vmatpush1.msra.mxu0 0.0
  %622 = vmatprep.subr.mxu0 0.0
  %623 = vmatpush1.msra.mxu0 0.0
  %624 = vmatprep.subr.mxu0 0.0
  %625 = vmatpush1.msra.mxu0 0.0
  %626 = vmatprep.subr.mxu0 0.0
  %627 = vmatpush1.msra.mxu0 0.0
  %628 = vmatprep.subr.mxu0 0.0
  %629 = vmatpush1.msra.mxu0 0.0
  %630 = vmatprep.subr.mxu0 0.0
  %631 = vmatpush1.msra.mxu0 0.0
  %632 = vmatprep.subr.mxu0 0.0
  %633 = vmatpush1.msra.mxu0 0.0
  %634 = vmatprep.subr.mxu0 0.0
  %635 = vmatpush1.msra.mxu0 0.0
  %636 = vmatprep.subr.mxu0 0.0
  %637 = vmatpush1.msra.mxu0 0.0
  %638 = vmatprep.subr.mxu0 0.0
  %639 = vmatpush1.msra.mxu0 0.0
  %640 = vmatprep.subr.mxu0 0.0
  %641 = vmatpush1.msra.mxu0 0.0
  %642 = vmatprep.subr.mxu0 0.0
  %643 = vmatpush1.msra.mxu0 0.0
  %644 = vmatprep.subr.mxu0 0.0
  %645 = vmatpush1.msra.mxu0 0.0
  %646 = vmatprep.subr.mxu0 0.0
  %647 = vmatpush1.msra.mxu0 0.0
  %648 = vmatprep.subr.mxu0 0.0
  %649 = vmatpush1.msra.mxu0 0.0
  %650 = vmatprep.subr.mxu0 0.0
  %651 = vmatpush1.msra.mxu0 0.0
  %652 = vmatprep.subr.mxu0 0.0
  %653 = vmatpush1.msra.mxu0 0.0
  %654 = vmatprep.subr.mxu0 0.0
  %655 = vmatpush1.msra.mxu0 0.0
  %656 = vmatprep.subr.mxu0 0.0
  %657 = vmatpush1.msra.mxu0 0.0
  %658 = vmatprep.subr.mxu0 0.0
  %659 = vmatpush1.msra.mxu0 0.0
  %660 = vmatprep.subr.mxu0 0.0
  %661 = vmatpush1.msra.mxu0 0.0
  %662 = vmatprep.subr.mxu0 0.0
  %663 = vmatpush1.msra.mxu0 0.0
  %664 = vmatprep.subr.mxu0 0.0
  %665 = vmatpush1.msra.mxu0 0.0
  %666 = vmatprep.subr.mxu0 0.0
  %667 = vmatpush1.msra.mxu0 0.0
  %668 = vmatprep.subr.mxu0 0.0
  %669 = vmatpush1.msra.mxu0 0.0
  %670 = vmatprep.subr.mxu0 0.0
  %671 = vmatpush1.msra.mxu0 0.0
  %672 = vmatprep.subr.mxu0 0.0
  %673 = vmatpush1.msra.mxu0 0.0
  %674 = vmatprep.subr.mxu0 0.0
  %675 = vmatpush1.msra.mxu0 0.0
  %676 = vmatprep.mubr.f32.mxu0 0.0
  %677 = vmatmul.mubr.f32.gmra.mrb[0].mxu0 %v610
  %v678 = vpop.f32.mrb[0].mxu0
  %v679 = vadd.f32 %v195, %v678
  %v680 = vpop.f32.mrb[0].mxu0
  %681 = vdwg.mxu0
  %s682 = scalar_lea.vmem [#allocation2], 32
  %v683 = vld [vmem:[%s682] sm:$0xff]
  %v684 = vadd.f32 %v683, %v679
  %v685 = vxor.u32 %v684, 2147483648
  %v686 = vmul.f32 %v685, 1.442695
  %v687 = vpow.pop %v686
  %v688 = vadd.f32 %v687, 1.0
  %v689 = vrcp.pop %v688
  %v690 = vmul.f32 1.0, %v689
  %692 = vrot.lane.b32.xlu0 %v679, 64
  %v693 = vpop.permute.xlu0 %692
  %v695 = vmul.f32 %v690, %v693
  %697 = vrot.lane.b32.xlu0 %v695, 64
  %v698 = vpop.permute.xlu0 %697
  %v700 = vadd.f32 %v683, %v698
  %v701 = vtanh.pop %v700
  %v702 = vsub.f32 1.0, %v690
  %704 = vrot.lane.b32.xlu0 %v701, 96
  %v705 = vpop.permute.xlu0 %704
  %v707 = vmul.f32 %v702, %v705
  %v708 = vmul.f32 %v690, %v606
  %v709 = vadd.f32 %v707, %v708
  %711 = vrot.lane.b32.xlu0 %v709, 96
  %v712 = vpop.permute.xlu0 %711
  %v713 = vsel %vm197, %v712, 0
  %715 = vmatprep.subr.mxu0 0.0
  %716 = vmatpush1.msra.mxu0 %v186
  %717 = vmatprep.subr.mxu0 0.0
  %718 = vmatpush1.msra.mxu0 %v187
  %719 = vmatprep.subr.mxu0 0.0
  %720 = vmatpush1.msra.mxu0 %v188
  %721 = vmatprep.subr.mxu0 0.0
  %722 = vmatpush1.msra.mxu0 %v189
  %723 = vmatprep.subr.mxu0 0.0
  %724 = vmatpush1.msra.mxu0 0.0
  %725 = vmatprep.subr.mxu0 0.0
  %726 = vmatpush1.msra.mxu0 0.0
  %727 = vmatprep.subr.mxu0 0.0
  %728 = vmatpush1.msra.mxu0 0.0
  %729 = vmatprep.subr.mxu0 0.0
  %730 = vmatpush1.msra.mxu0 0.0
  %731 = vmatprep.subr.mxu0 0.0
  %732 = vmatpush1.msra.mxu0 0.0
  %733 = vmatprep.subr.mxu0 0.0
  %734 = vmatpush1.msra.mxu0 0.0
  %735 = vmatprep.subr.mxu0 0.0
  %736 = vmatpush1.msra.mxu0 0.0
  %737 = vmatprep.subr.mxu0 0.0
  %738 = vmatpush1.msra.mxu0 0.0
  %739 = vmatprep.subr.mxu0 0.0
  %740 = vmatpush1.msra.mxu0 0.0
  %741 = vmatprep.subr.mxu0 0.0
  %742 = vmatpush1.msra.mxu0 0.0
  %743 = vmatprep.subr.mxu0 0.0
  %744 = vmatpush1.msra.mxu0 0.0
  %745 = vmatprep.subr.mxu0 0.0
  %746 = vmatpush1.msra.mxu0 0.0
  %747 = vmatprep.subr.mxu0 0.0
  %748 = vmatpush1.msra.mxu0 0.0
  %749 = vmatprep.subr.mxu0 0.0
  %750 = vmatpush1.msra.mxu0 0.0
  %751 = vmatprep.subr.mxu0 0.0
  %752 = vmatpush1.msra.mxu0 0.0
  %753 = vmatprep.subr.mxu0 0.0
  %754 = vmatpush1.msra.mxu0 0.0
  %755 = vmatprep.subr.mxu0 0.0
  %756 = vmatpush1.msra.mxu0 0.0
  %757 = vmatprep.subr.mxu0 0.0
  %758 = vmatpush1.msra.mxu0 0.0
  %759 = vmatprep.subr.mxu0 0.0
  %760 = vmatpush1.msra.mxu0 0.0
  %761 = vmatprep.subr.mxu0 0.0
  %762 = vmatpush1.msra.mxu0 0.0
  %763 = vmatprep.subr.mxu0 0.0
  %764 = vmatpush1.msra.mxu0 0.0
  %765 = vmatprep.subr.mxu0 0.0
  %766 = vmatpush1.msra.mxu0 0.0
  %767 = vmatprep.subr.mxu0 0.0
  %768 = vmatpush1.msra.mxu0 0.0
  %769 = vmatprep.subr.mxu0 0.0
  %770 = vmatpush1.msra.mxu0 0.0
  %771 = vmatprep.subr.mxu0 0.0
  %772 = vmatpush1.msra.mxu0 0.0
  %773 = vmatprep.subr.mxu0 0.0
  %774 = vmatpush1.msra.mxu0 0.0
  %775 = vmatprep.subr.mxu0 0.0
  %776 = vmatpush1.msra.mxu0 0.0
  %777 = vmatprep.subr.mxu0 0.0
  %778 = vmatpush1.msra.mxu0 0.0
  %779 = vmatprep.mubr.f32.mxu0 0.0
  %780 = vmatmul.mubr.f32.gmra.mrb[0].mxu0 %v713
  %v781 = vpop.f32.mrb[0].mxu0
  %v782 = vadd.f32 %v195, %v781
  %v783 = vpop.f32.mrb[0].mxu0
  %784 = vdwg.mxu0
  %s785 = scalar_lea.vmem [#allocation2], 40
  %v786 = vld [vmem:[%s785] sm:$0xff]
  %v787 = vadd.f32 %v786, %v782
  %v788 = vxor.u32 %v787, 2147483648
  %v789 = vmul.f32 %v788, 1.442695
  %v790 = vpow.pop %v789
  %v791 = vadd.f32 %v790, 1.0
  %v792 = vrcp.pop %v791
  %v793 = vmul.f32 1.0, %v792
  %795 = vrot.lane.b32.xlu0 %v782, 64
  %v796 = vpop.permute.xlu0 %795
  %v798 = vmul.f32 %v793, %v796
  %800 = vrot.lane.b32.xlu0 %v798, 64
  %v801 = vpop.permute.xlu0 %800
  %v803 = vadd.f32 %v786, %v801
  %v804 = vtanh.pop %v803
  %v805 = vsub.f32 1.0, %v793
  %807 = vrot.lane.b32.xlu0 %v804, 96
  %v808 = vpop.permute.xlu0 %807
  %v810 = vmul.f32 %v805, %v808
  %v811 = vmul.f32 %v793, %v709
  %v812 = vadd.f32 %v810, %v811
  %814 = vrot.lane.b32.xlu0 %v812, 96
  %v815 = vpop.permute.xlu0 %814
  %v816 = vsel %vm197, %v815, 0
  %818 = vmatprep.subr.mxu0 0.0
  %819 = vmatpush1.msra.mxu0 %v186
  %820 = vmatprep.subr.mxu0 0.0
  %821 = vmatpush1.msra.mxu0 %v187
  %822 = vmatprep.subr.mxu0 0.0
  %823 = vmatpush1.msra.mxu0 %v188
  %824 = vmatprep.subr.mxu0 0.0
  %825 = vmatpush1.msra.mxu0 %v189
  %826 = vmatprep.subr.mxu0 0.0
  %827 = vmatpush1.msra.mxu0 0.0
  %828 = vmatprep.subr.mxu0 0.0
  %829 = vmatpush1.msra.mxu0 0.0
  %830 = vmatprep.subr.mxu0 0.0
  %831 = vmatpush1.msra.mxu0 0.0
  %832 = vmatprep.subr.mxu0 0.0
  %833 = vmatpush1.msra.mxu0 0.0
  %834 = vmatprep.subr.mxu0 0.0
  %835 = vmatpush1.msra.mxu0 0.0
  %836 = vmatprep.subr.mxu0 0.0
  %837 = vmatpush1.msra.mxu0 0.0
  %838 = vmatprep.subr.mxu0 0.0
  %839 = vmatpush1.msra.mxu0 0.0
  %840 = vmatprep.subr.mxu0 0.0
  %841 = vmatpush1.msra.mxu0 0.0
  %842 = vmatprep.subr.mxu0 0.0
  %843 = vmatpush1.msra.mxu0 0.0
  %844 = vmatprep.subr.mxu0 0.0
  %845 = vmatpush1.msra.mxu0 0.0
  %846 = vmatprep.subr.mxu0 0.0
  %847 = vmatpush1.msra.mxu0 0.0
  %848 = vmatprep.subr.mxu0 0.0
  %849 = vmatpush1.msra.mxu0 0.0
  %850 = vmatprep.subr.mxu0 0.0
  %851 = vmatpush1.msra.mxu0 0.0
  %852 = vmatprep.subr.mxu0 0.0
  %853 = vmatpush1.msra.mxu0 0.0
  %854 = vmatprep.subr.mxu0 0.0
  %855 = vmatpush1.msra.mxu0 0.0
  %856 = vmatprep.subr.mxu0 0.0
  %857 = vmatpush1.msra.mxu0 0.0
  %858 = vmatprep.subr.mxu0 0.0
  %859 = vmatpush1.msra.mxu0 0.0
  %860 = vmatprep.subr.mxu0 0.0
  %861 = vmatpush1.msra.mxu0 0.0
  %862 = vmatprep.subr.mxu0 0.0
  %863 = vmatpush1.msra.mxu0 0.0
  %864 = vmatprep.subr.mxu0 0.0
  %865 = vmatpush1.msra.mxu0 0.0
  %866 = vmatprep.subr.mxu0 0.0
  %867 = vmatpush1.msra.mxu0 0.0
  %868 = vmatprep.subr.mxu0 0.0
  %869 = vmatpush1.msra.mxu0 0.0
  %870 = vmatprep.subr.mxu0 0.0
  %871 = vmatpush1.msra.mxu0 0.0
  %872 = vmatprep.subr.mxu0 0.0
  %873 = vmatpush1.msra.mxu0 0.0
  %874 = vmatprep.subr.mxu0 0.0
  %875 = vmatpush1.msra.mxu0 0.0
  %876 = vmatprep.subr.mxu0 0.0
  %877 = vmatpush1.msra.mxu0 0.0
  %878 = vmatprep.subr.mxu0 0.0
  %879 = vmatpush1.msra.mxu0 0.0
  %880 = vmatprep.subr.mxu0 0.0
  %881 = vmatpush1.msra.mxu0 0.0
  %882 = vmatprep.mubr.f32.mxu0 0.0
  %883 = vmatmul.mubr.f32.gmra.mrb[0].mxu0 %v816
  %v884 = vpop.f32.mrb[0].mxu0
  %v885 = vadd.f32 %v195, %v884
  %v886 = vpop.f32.mrb[0].mxu0
  %887 = vdwg.mxu0
  %s888 = scalar_lea.vmem [#allocation2], 48
  %v889 = vld [vmem:[%s888] sm:$0xff]
  %v890 = vadd.f32 %v889, %v885
  %v891 = vxor.u32 %v890, 2147483648
  %v892 = vmul.f32 %v891, 1.442695
  %v893 = vpow.pop %v892
  %v894 = vadd.f32 %v893, 1.0
  %v895 = vrcp.pop %v894
  %v896 = vmul.f32 1.0, %v895
  %898 = vrot.lane.b32.xlu0 %v885, 64
  %v899 = vpop.permute.xlu0 %898
  %v901 = vmul.f32 %v896, %v899
  %903 = vrot.lane.b32.xlu0 %v901, 64
  %v904 = vpop.permute.xlu0 %903
  %v906 = vadd.f32 %v889, %v904
  %v907 = vtanh.pop %v906
  %v908 = vsub.f32 1.0, %v896
  %910 = vrot.lane.b32.xlu0 %v907, 96
  %v911 = vpop.permute.xlu0 %910
  %v913 = vmul.f32 %v908, %v911
  %v914 = vmul.f32 %v896, %v812
  %v915 = vadd.f32 %v913, %v914
  %917 = vrot.lane.b32.xlu0 %v915, 96
  %v918 = vpop.permute.xlu0 %917
  %v919 = vsel %vm197, %v918, 0
  %921 = vmatprep.subr.mxu0 0.0
  %922 = vmatpush1.msra.mxu0 %v186
  %923 = vmatprep.subr.mxu0 0.0
  %924 = vmatpush1.msra.mxu0 %v187
  %925 = vmatprep.subr.mxu0 0.0
  %926 = vmatpush1.msra.mxu0 %v188
  %927 = vmatprep.subr.mxu0 0.0
  %928 = vmatpush1.msra.mxu0 %v189
  %929 = vmatprep.subr.mxu0 0.0
  %930 = vmatpush1.msra.mxu0 0.0
  %931 = vmatprep.subr.mxu0 0.0
  %932 = vmatpush1.msra.mxu0 0.0
  %933 = vmatprep.subr.mxu0 0.0
  %934 = vmatpush1.msra.mxu0 0.0
  %935 = vmatprep.subr.mxu0 0.0
  %936 = vmatpush1.msra.mxu0 0.0
  %937 = vmatprep.subr.mxu0 0.0
  %938 = vmatpush1.msra.mxu0 0.0
  %939 = vmatprep.subr.mxu0 0.0
  %940 = vmatpush1.msra.mxu0 0.0
  %941 = vmatprep.subr.mxu0 0.0
  %942 = vmatpush1.msra.mxu0 0.0
  %943 = vmatprep.subr.mxu0 0.0
  %944 = vmatpush1.msra.mxu0 0.0
  %945 = vmatprep.subr.mxu0 0.0
  %946 = vmatpush1.msra.mxu0 0.0
  %947 = vmatprep.subr.mxu0 0.0
  %948 = vmatpush1.msra.mxu0 0.0
  %949 = vmatprep.subr.mxu0 0.0
  %950 = vmatpush1.msra.mxu0 0.0
  %951 = vmatprep.subr.mxu0 0.0
  %952 = vmatpush1.msra.mxu0 0.0
  %953 = vmatprep.subr.mxu0 0.0
  %954 = vmatpush1.msra.mxu0 0.0
  %955 = vmatprep.subr.mxu0 0.0
  %956 = vmatpush1.msra.mxu0 0.0
  %957 = vmatprep.subr.mxu0 0.0
  %958 = vmatpush1.msra.mxu0 0.0
  %959 = vmatprep.subr.mxu0 0.0
  %960 = vmatpush1.msra.mxu0 0.0
  %961 = vmatprep.subr.mxu0 0.0
  %962 = vmatpush1.msra.mxu0 0.0
  %963 = vmatprep.subr.mxu0 0.0
  %964 = vmatpush1.msra.mxu0 0.0
  %965 = vmatprep.subr.mxu0 0.0
  %966 = vmatpush1.msra.mxu0 0.0
  %967 = vmatprep.subr.mxu0 0.0
  %968 = vmatpush1.msra.mxu0 0.0
  %969 = vmatprep.subr.mxu0 0.0
  %970 = vmatpush1.msra.mxu0 0.0
  %971 = vmatprep.subr.mxu0 0.0
  %972 = vmatpush1.msra.mxu0 0.0
  %973 = vmatprep.subr.mxu0 0.0
  %974 = vmatpush1.msra.mxu0 0.0
  %975 = vmatprep.subr.mxu0 0.0
  %976 = vmatpush1.msra.mxu0 0.0
  %977 = vmatprep.subr.mxu0 0.0
  %978 = vmatpush1.msra.mxu0 0.0
  %979 = vmatprep.subr.mxu0 0.0
  %980 = vmatpush1.msra.mxu0 0.0
  %981 = vmatprep.subr.mxu0 0.0
  %982 = vmatpush1.msra.mxu0 0.0
  %983 = vmatprep.subr.mxu0 0.0
  %984 = vmatpush1.msra.mxu0 0.0
  %985 = vmatprep.mubr.f32.mxu0 0.0
  %986 = vmatmul.mubr.f32.gmra.mrb[0].mxu0 %v919
  %v987 = vpop.f32.mrb[0].mxu0
  %v988 = vadd.f32 %v195, %v987
  %v989 = vpop.f32.mrb[0].mxu0
  %990 = vdwg.mxu0
  %s991 = scalar_lea.vmem [#allocation2], 56
  %v992 = vld [vmem:[%s991] sm:$0xff]
  %v993 = vadd.f32 %v992, %v988
  %v994 = vxor.u32 %v993, 2147483648
  %v995 = vmul.f32 %v994, 1.442695
  %v996 = vpow.pop %v995
  %v997 = vadd.f32 %v996, 1.0
  %v998 = vrcp.pop %v997
  %v999 = vmul.f32 1.0, %v998
  %1001 = vrot.lane.b32.xlu0 %v988, 64
  %v1002 = vpop.permute.xlu0 %1001
  %v1004 = vmul.f32 %v999, %v1002
  %1006 = vrot.lane.b32.xlu0 %v1004, 64
  %v1007 = vpop.permute.xlu0 %1006
  %v1009 = vadd.f32 %v992, %v1007
  %v1010 = vtanh.pop %v1009
  %v1011 = vsub.f32 1.0, %v999
  %1013 = vrot.lane.b32.xlu0 %v1010, 96
  %v1014 = vpop.permute.xlu0 %1013
  %v1016 = vmul.f32 %v1011, %v1014
  %v1017 = vmul.f32 %v999, %v915
  %v1018 = vadd.f32 %v1016, %v1017
  %v1019 = vld [vmem:[%s5] sm:$0xff]
  %v1020 = vld [vmem:[%s5 + $0x8] sm:$0xff]
  %v1021 = vld [vmem:[%s5 + $0x10] sm:$0xff]
  %v1022 = vld [vmem:[%s5 + $0x18] sm:$0xff]
  %v1023 = vld [vmem:[%s6] sm:$0x1]
  %v1025 = vlaneseq
  %v1026 = vshrl.u32 %v1025, 7
  %v1027 = vsub.s32 0, %v1026
  %v1028 = vrot.slane %v1023, %v1027
  %1031 = vrot.lane.b32.xlu0 %v1018, 96
  %v1032 = vpop.permute.xlu0 %1031
  %v1033 = vsel %vm197, %v1032, 0
  %1035 = vmatprep.subr.mxu0 0.0
  %1036 = vmatpush1.msra.mxu0 %v1019
  %1037 = vmatprep.subr.mxu0 0.0
  %1038 = vmatpush1.msra.mxu0 %v1020
  %1039 = vmatprep.subr.mxu0 0.0
  %1040 = vmatpush1.msra.mxu0 %v1021
  %1041 = vmatprep.subr.mxu0 0.0
  %1042 = vmatpush1.msra.mxu0 %v1022
  %1043 = vmatprep.subr.mxu0 0.0
  %1044 = vmatpush1.msra.mxu0 0.0
  %1045 = vmatprep.subr.mxu0 0.0
  %1046 = vmatpush1.msra.mxu0 0.0
  %1047 = vmatprep.subr.mxu0 0.0
  %1048 = vmatpush1.msra.mxu0 0.0
  %1049 = vmatprep.subr.mxu0 0.0
  %1050 = vmatpush1.msra.mxu0 0.0
  %1051 = vmatprep.subr.mxu0 0.0
  %1052 = vmatpush1.msra.mxu0 0.0
  %1053 = vmatprep.subr.mxu0 0.0
  %1054 = vmatpush1.msra.mxu0 0.0
  %1055 = vmatprep.subr.mxu0 0.0
  %1056 = vmatpush1.msra.mxu0 0.0
  %1057 = vmatprep.subr.mxu0 0.0
  %1058 = vmatpush1.msra.mxu0 0.0
  %1059 = vmatprep.subr.mxu0 0.0
  %1060 = vmatpush1.msra.mxu0 0.0
  %1061 = vmatprep.subr.mxu0 0.0
  %1062 = vmatpush1.msra.mxu0 0.0
  %1063 = vmatprep.subr.mxu0 0.0
  %1064 = vmatpush1.msra.mxu0 0.0
  %1065 = vmatprep.subr.mxu0 0.0
  %1066 = vmatpush1.msra.mxu0 0.0
  %1067 = vmatprep.subr.mxu0 0.0
  %1068 = vmatpush1.msra.mxu0 0.0
  %1069 = vmatprep.subr.mxu0 0.0
  %1070 = vmatpush1.msra.mxu0 0.0
  %1071 = vmatprep.subr.mxu0 0.0
  %1072 = vmatpush1.msra.mxu0 0.0
  %1073 = vmatprep.subr.mxu0 0.0
  %1074 = vmatpush1.msra.mxu0 0.0
  %1075 = vmatprep.subr.mxu0 0.0
  %1076 = vmatpush1.msra.mxu0 0.0
  %1077 = vmatprep.subr.mxu0 0.0
  %1078 = vmatpush1.msra.mxu0 0.0
  %1079 = vmatprep.subr.mxu0 0.0
  %1080 = vmatpush1.msra.mxu0 0.0
  %1081 = vmatprep.subr.mxu0 0.0
  %1082 = vmatpush1.msra.mxu0 0.0
  %1083 = vmatprep.subr.mxu0 0.0
  %1084 = vmatpush1.msra.mxu0 0.0
  %1085 = vmatprep.subr.mxu0 0.0
  %1086 = vmatpush1.msra.mxu0 0.0
  %1087 = vmatprep.subr.mxu0 0.0
  %1088 = vmatpush1.msra.mxu0 0.0
  %1089 = vmatprep.subr.mxu0 0.0
  %1090 = vmatpush1.msra.mxu0 0.0
  %1091 = vmatprep.subr.mxu0 0.0
  %1092 = vmatpush1.msra.mxu0 0.0
  %1093 = vmatprep.subr.mxu0 0.0
  %1094 = vmatpush1.msra.mxu0 0.0
  %1095 = vmatprep.subr.mxu0 0.0
  %1096 = vmatpush1.msra.mxu0 0.0
  %1097 = vmatprep.subr.mxu0 0.0
  %1098 = vmatpush1.msra.mxu0 0.0
  %1099 = vmatprep.mubr.f32.mxu0 0.0
  %1100 = vmatmul.mubr.f32.gmra.mrb[0].mxu0 %v1033
  %v1101 = vpop.f32.mrb[0].mxu0
  %v1102 = vadd.f32 %v1028, %v1101
  %v1103 = vpop.f32.mrb[0].mxu0
  %1104 = vdwg.mxu0
  %v1105 = vmax.f32 %v1102, 0.0
  %v1106 = vld [vmem:[%s7] sm:$0xff]
  %v1107 = vld [vmem:[%s7 + $0x8] sm:$0xff]
  %v1108 = vld [vmem:[%s7 + $0x10] sm:$0xff]
  %v1109 = vld [vmem:[%s7 + $0x18] sm:$0xff]
  %v1110 = vld [vmem:[%s8] sm:$0x1]
  %v1112 = vlaneseq
  %v1113 = vshrl.u32 %v1112, 7
  %v1114 = vsub.s32 0, %v1113
  %v1115 = vrot.slane %v1110, %v1114
  %v1118 = vsel %vm197, %v1105, 0
  %1120 = vmatprep.subr.mxu0 0.0
  %1121 = vmatpush1.msra.mxu0 %v1106
  %1122 = vmatprep.subr.mxu0 0.0
  %1123 = vmatpush1.msra.mxu0 %v1107
  %1124 = vmatprep.subr.mxu0 0.0
  %1125 = vmatpush1.msra.mxu0 %v1108
  %1126 = vmatprep.subr.mxu0 0.0
  %1127 = vmatpush1.msra.mxu0 %v1109
  %1128 = vmatprep.subr.mxu0 0.0
  %1129 = vmatpush1.msra.mxu0 0.0
  %1130 = vmatprep.subr.mxu0 0.0
  %1131 = vmatpush1.msra.mxu0 0.0
  %1132 = vmatprep.subr.mxu0 0.0
  %1133 = vmatpush1.msra.mxu0 0.0
  %1134 = vmatprep.subr.mxu0 0.0
  %1135 = vmatpush1.msra.mxu0 0.0
  %1136 = vmatprep.subr.mxu0 0.0
  %1137 = vmatpush1.msra.mxu0 0.0
  %1138 = vmatprep.subr.mxu0 0.0
  %1139 = vmatpush1.msra.mxu0 0.0
  %1140 = vmatprep.subr.mxu0 0.0
  %1141 = vmatpush1.msra.mxu0 0.0
  %1142 = vmatprep.subr.mxu0 0.0
  %1143 = vmatpush1.msra.mxu0 0.0
  %1144 = vmatprep.subr.mxu0 0.0
  %1145 = vmatpush1.msra.mxu0 0.0
  %1146 = vmatprep.subr.mxu0 0.0
  %1147 = vmatpush1.msra.mxu0 0.0
  %1148 = vmatprep.subr.mxu0 0.0
  %1149 = vmatpush1.msra.mxu0 0.0
  %1150 = vmatprep.subr.mxu0 0.0
  %1151 = vmatpush1.msra.mxu0 0.0
  %1152 = vmatprep.subr.mxu0 0.0
  %1153 = vmatpush1.msra.mxu0 0.0
  %1154 = vmatprep.subr.mxu0 0.0
  %1155 = vmatpush1.msra.mxu0 0.0
  %1156 = vmatprep.subr.mxu0 0.0
  %1157 = vmatpush1.msra.mxu0 0.0
  %1158 = vmatprep.subr.mxu0 0.0
  %1159 = vmatpush1.msra.mxu0 0.0
  %1160 = vmatprep.subr.mxu0 0.0
  %1161 = vmatpush1.msra.mxu0 0.0
  %1162 = vmatprep.subr.mxu0 0.0
  %1163 = vmatpush1.msra.mxu0 0.0
  %1164 = vmatprep.subr.mxu0 0.0
  %1165 = vmatpush1.msra.mxu0 0.0
  %1166 = vmatprep.subr.mxu0 0.0
  %1167 = vmatpush1.msra.mxu0 0.0
  %1168 = vmatprep.subr.mxu0 0.0
  %1169 = vmatpush1.msra.mxu0 0.0
  %1170 = vmatprep.subr.mxu0 0.0
  %1171 = vmatpush1.msra.mxu0 0.0
  %1172 = vmatprep.subr.mxu0 0.0
  %1173 = vmatpush1.msra.mxu0 0.0
  %1174 = vmatprep.subr.mxu0 0.0
  %1175 = vmatpush1.msra.mxu0 0.0
  %1176 = vmatprep.subr.mxu0 0.0
  %1177 = vmatpush1.msra.mxu0 0.0
  %1178 = vmatprep.subr.mxu0 0.0
  %1179 = vmatpush1.msra.mxu0 0.0
  %1180 = vmatprep.subr.mxu0 0.0
  %1181 = vmatpush1.msra.mxu0 0.0
  %1182 = vmatprep.subr.mxu0 0.0
  %1183 = vmatpush1.msra.mxu0 0.0
  %1184 = vmatprep.mubr.f32.mxu0 0.0
  %1185 = vmatmul.mubr.f32.gmra.mrb[0].mxu0 %v1118
  %v1186 = vpop.f32.mrb[0].mxu0
  %v1187 = vadd.f32 %v1115, %v1186
  %v1188 = vpop.f32.mrb[0].mxu0
  %1189 = vdwg.mxu0
  %1190 = vst [vmem:[%s9] sm:$0xff] %v1187
  // Predicated region
  $region38: #{encoder_forward.1} parent=0 // pred_check
    _
  $region39: #{encoder_forward.1} parent=0 // pred_check_branch
    %1192 = sbr.rel (0) target = $region41
  $region40: #{encoder_forward.1} parent=0 // pred_region
    _
  $region41: #{encoder_forward.1} parent=0 // pred_fallthru
    _
  // Predicated region
  $region42: #{encoder_forward.1} parent=0 // pred_check
    _
  $region43: #{encoder_forward.1} parent=0 // pred_check_branch
    %1194 = sbr.rel (0) target = $region45
  $region44: #{encoder_forward.1} parent=0 // pred_region
    _
  $region45: #{encoder_forward.1} parent=0 // pred_fallthru
    _

</llo_original>
